<compile_context>
chip_gen: v6e
topology: v6e:2x2x1
jax: 0.10.0
libtpu: 0.0.40
codegen_flags: <defaults>
</compile_context>

<pallas_src>
import functools
import math

import jax
import jax.numpy as jnp
from jax.experimental import pallas as pl
from jax.experimental.pallas import tpu as pltpu

LN_EPS = 1e-5    # torch.nn.LayerNorm default
OUT_PAD = 128    # last Linear(128, 2) padded to a lane-dense 128 columns


def _layernorm(x, gamma, beta):
    mu = jnp.mean(x, axis=-1, keepdims=True)
    xc = x - mu
    var = jnp.mean(xc * xc, axis=-1, keepdims=True)
    inv = jax.lax.rsqrt(var + LN_EPS)          # rsqrt -> EUP slot (free-ish)
    return xc * inv * gamma + beta


def head_kernel(x_ref,
                w1_ref, b1_ref, g1_ref, be1_ref,
                w2_ref, b2_ref, g2_ref, be2_ref,
                w3_ref, b3_ref,
                w4_ref, b4_ref,
                o_ref):
    # Activations stream per batch tile; weights are resident (constant index_map).
    x = x_ref[...]

    # Linear(1024,512) + ReLU + LayerNorm(512)   (bf16 matmul, f32 acc/elementwise)
    h = jnp.dot(x.astype(jnp.bfloat16), w1_ref[...],
                preferred_element_type=jnp.float32) + b1_ref[...]
    h = jnp.maximum(h, 0.0)
    h = _layernorm(h, g1_ref[...], be1_ref[...])

    # Linear(512,256) + ReLU + LayerNorm(256)
    h = jnp.dot(h.astype(jnp.bfloat16), w2_ref[...],
                preferred_element_type=jnp.float32) + b2_ref[...]
    h = jnp.maximum(h, 0.0)
    h = _layernorm(h, g2_ref[...], be2_ref[...])

    # Linear(256,128) + Tanh
    h = jnp.dot(h.astype(jnp.bfloat16), w3_ref[...],
                preferred_element_type=jnp.float32) + b3_ref[...]
    h = jnp.tanh(h)

    # Linear(128, 2 -> 128 zero-padded) + Tanh; lane-dense store, sliced in wrapper
    h = jnp.dot(h.astype(jnp.bfloat16), w4_ref[...],
                preferred_element_type=jnp.float32) + b4_ref[...]
    o_ref[...] = jnp.tanh(h).astype(o_ref.dtype)


def _round_up(n, m):
    return ((n + m - 1) // m) * m


@functools.partial(jax.jit, static_argnames=("tb",))
def geo_head_forward(x, params, tb=256):
    """x: (B, 1024) float32 -> (B, 2) float32."""
    B = x.shape[0]
    TB = min(tb, _round_up(B, 8))          # batch tile, sublane-aligned
    B_pad = _round_up(B, TB)
    if B_pad != B:
        x = jnp.pad(x, ((0, B_pad - B), (0, 0)))

    grid = (B_pad // TB,)
    x_spec = pl.BlockSpec((TB, 1024), lambda i: (i, 0))
    out_spec = pl.BlockSpec((TB, OUT_PAD), lambda i: (i, 0))

    def const_spec(shape):
        # Whole-array block with constant index: DMA'd once, resident across tiles.
        return pl.BlockSpec(shape, lambda i: (0, 0))

    w_args = (params["w1"], params["b1"], params["g1"], params["be1"],
              params["w2"], params["b2"], params["g2"], params["be2"],
              params["w3"], params["b3"],
              params["w4"], params["b4"])
    in_specs = [x_spec] + [const_spec(a.shape) for a in w_args]

    out_pad = pl.pallas_call(
        head_kernel,
        out_shape=jax.ShapeDtypeStruct((B_pad, OUT_PAD), jnp.float32),
        grid=grid,
        in_specs=in_specs,
        out_specs=out_spec,
        compiler_params=pltpu.CompilerParams(
            dimension_semantics=("parallel",)),
    )(x, *w_args)
    # TODO(synk): if this head runs inside a larger model every step, keep the
    # bf16 weights resident across calls (cross-pallas_call prefetch) instead of
    # re-DMAing ~1.4 MB per invocation.
    return out_pad[:B, :2]


def _xavier_uniform(key, fan_in, fan_out):
    # torch.nn.init.xavier_uniform_ on weight of shape (out, in); bound identical
    # for the transposed (in, out) storage we use here.
    bound = math.sqrt(6.0 / (fan_in + fan_out))
    return jax.random.uniform(key, (fan_in, fan_out), jnp.float32,
                              minval=-bound, maxval=bound)


def init_params(key):
    k1, k2, k3, k4 = jax.random.split(key, 4)
    w4 = _xavier_uniform(k4, 128, 2)                       # real (in=128, out=2)
    w4_pad = jnp.zeros((128, OUT_PAD), jnp.float32).at[:, :2].set(w4)
    b4_pad = jnp.zeros((1, OUT_PAD), jnp.float32).at[:, :2].set(0.01)
    params = {
        # Linear weights stored (in, out) in bf16; biases 0.01 per _init_weights.
        "w1": _xavier_uniform(k1, 1024, 512).astype(jnp.bfloat16),
        "b1": jnp.full((1, 512), 0.01, jnp.float32),
        "g1": jnp.ones((1, 512), jnp.float32),    # LayerNorm(512) weight (ones)
        "be1": jnp.zeros((1, 512), jnp.float32),  # LayerNorm(512) bias  (zeros)
        "w2": _xavier_uniform(k2, 512, 256).astype(jnp.bfloat16),
        "b2": jnp.full((1, 256), 0.01, jnp.float32),
        "g2": jnp.ones((1, 256), jnp.float32),
        "be2": jnp.zeros((1, 256), jnp.float32),
        "w3": _xavier_uniform(k3, 256, 128).astype(jnp.bfloat16),
        "b3": jnp.full((1, 128), 0.01, jnp.float32),
        "w4": w4_pad.astype(jnp.bfloat16),
        "b4": b4_pad,
    }
    return params


def _reference_bf16(x, p):
    # Mirrors kernel numerics exactly (bf16 matmul operands, f32 acc/elementwise).
    def dot(a, w):
        return jnp.dot(a.astype(jnp.bfloat16), w, preferred_element_type=jnp.float32)
    h = dot(x, p["w1"]) + p["b1"]
    h = _layernorm(jnp.maximum(h, 0.0), p["g1"], p["be1"])
    h = dot(h, p["w2"]) + p["b2"]
    h = _layernorm(jnp.maximum(h, 0.0), p["g2"], p["be2"])
    h = jnp.tanh(dot(h, p["w3"]) + p["b3"])
    h = jnp.tanh(dot(h, p["w4"]) + p["b4"])
    return h[:, :2]


def _reference_f32(x, p):
    # Spec-fidelity f32 reference (PyTorch module semantics).
    h = x @ p["w1"].astype(jnp.float32) + p["b1"]
    h = _layernorm(jnp.maximum(h, 0.0), p["g1"], p["be1"])
    h = h @ p["w2"].astype(jnp.float32) + p["b2"]
    h = _layernorm(jnp.maximum(h, 0.0), p["g2"], p["be2"])
    h = jnp.tanh(h @ p["w3"].astype(jnp.float32) + p["b3"])
    h = jnp.tanh(h @ p["w4"].astype(jnp.float32) + p["b4"])
    return h[:, :2]


if __name__ == "__main__":
    key = jax.random.PRNGKey(0)
    kx, kx2, kp = jax.random.split(key, 3)
    params = init_params(kp)

    # Small aligned batch.
    B = 8
    x = jax.random.normal(kx, (B, 1024), jnp.float32)
    out = jax.block_until_ready(geo_head_forward(x, params))
    assert out.shape == (B, 2)
    err_mirror = float(jnp.max(jnp.abs(out - _reference_bf16(x, params))))
    err_spec = float(jnp.max(jnp.abs(out - _reference_f32(x, params))))
    assert err_mirror < 2e-3, f"kernel vs bf16 mirror max abs err {err_mirror}"
    assert err_spec < 1e-1, f"kernel vs f32 spec max abs err {err_spec}"

    # Ragged batch exercising the padding / batch-tiling path.
    B2 = 37
    x2 = jax.random.normal(kx2, (B2, 1024), jnp.float32)
    out2 = jax.block_until_ready(geo_head_forward(x2, params))
    assert out2.shape == (B2, 2)
    err2 = float(jnp.max(jnp.abs(out2 - _reference_bf16(x2, params))))
    assert err2 < 2e-3, f"ragged-batch kernel vs bf16 mirror max abs err {err2}"

    print("KERNEL_OK")
</pallas_src>

<mosaic_0001>
module attributes {stable_mosaic.version = 11 : i64} {
  func.func @head_kernel(%arg0: i32, %arg1: memref<8x1024xf32, #tpu.memory_space<vmem>>, %arg2: memref<1024x512xbf16, #tpu.memory_space<vmem>>, %arg3: memref<1x512xf32, #tpu.memory_space<vmem>>, %arg4: memref<1x512xf32, #tpu.memory_space<vmem>>, %arg5: memref<1x512xf32, #tpu.memory_space<vmem>>, %arg6: memref<512x256xbf16, #tpu.memory_space<vmem>>, %arg7: memref<1x256xf32, #tpu.memory_space<vmem>>, %arg8: memref<1x256xf32, #tpu.memory_space<vmem>>, %arg9: memref<1x256xf32, #tpu.memory_space<vmem>>, %arg10: memref<256x128xbf16, #tpu.memory_space<vmem>>, %arg11: memref<1x128xf32, #tpu.memory_space<vmem>>, %arg12: memref<128x128xbf16, #tpu.memory_space<vmem>>, %arg13: memref<1x128xf32, #tpu.memory_space<vmem>>, %arg14: memref<8x128xf32, #tpu.memory_space<vmem>>) attributes {dimension_semantics = [#tpu.dimension_semantics<parallel>], iteration_bounds = array<i64: 1>, scalar_prefetch = 0 : i64, scratch_operands = 0 : i64, tpu.core_type = #tpu.core_type<tc>, window_params = [{transform_indices = @transform_0, window_bounds = array<i64: 8, 1024>}, {pipeline_mode = #tpu.pipeline_mode<synchronous>, transform_indices = @transform_1, window_bounds = array<i64: 1024, 512>}, {pipeline_mode = #tpu.pipeline_mode<synchronous>, transform_indices = @transform_2, window_bounds = array<i64: 1, 512>}, {pipeline_mode = #tpu.pipeline_mode<synchronous>, transform_indices = @transform_3, window_bounds = array<i64: 1, 512>}, {pipeline_mode = #tpu.pipeline_mode<synchronous>, transform_indices = @transform_4, window_bounds = array<i64: 1, 512>}, {pipeline_mode = #tpu.pipeline_mode<synchronous>, transform_indices = @transform_5, window_bounds = array<i64: 512, 256>}, {pipeline_mode = #tpu.pipeline_mode<synchronous>, transform_indices = @transform_6, window_bounds = array<i64: 1, 256>}, {pipeline_mode = #tpu.pipeline_mode<synchronous>, transform_indices = @transform_7, window_bounds = array<i64: 1, 256>}, {pipeline_mode = #tpu.pipeline_mode<synchronous>, transform_indices = @transform_8, window_bounds = array<i64: 1, 256>}, {pipeline_mode = #tpu.pipeline_mode<synchronous>, transform_indices = @transform_9, window_bounds = array<i64: 256, 128>}, {pipeline_mode = #tpu.pipeline_mode<synchronous>, transform_indices = @transform_10, window_bounds = array<i64: 1, 128>}, {pipeline_mode = #tpu.pipeline_mode<synchronous>, transform_indices = @transform_11, window_bounds = array<i64: 128, 128>}, {pipeline_mode = #tpu.pipeline_mode<synchronous>, transform_indices = @transform_12, window_bounds = array<i64: 1, 128>}, {transform_indices = @transform_13, window_bounds = array<i64: 8, 128>}]} {
    %c0 = arith.constant 0 : index
    %c0_0 = arith.constant 0 : index
    %0 = vector.load %arg1[%c0, %c0_0] : memref<8x1024xf32, #tpu.memory_space<vmem>>, vector<8x1024xf32>
    %1 = arith.truncf %0 : vector<8x1024xf32> to vector<8x1024xbf16>
    %c0_1 = arith.constant 0 : index
    %c0_2 = arith.constant 0 : index
    %2 = vector.load %arg2[%c0_1, %c0_2] : memref<1024x512xbf16, #tpu.memory_space<vmem>>, vector<1024x512xbf16>
    %cst = arith.constant dense<0.000000e+00> : vector<8x512xf32>
    %3 = tpu.matmul %1, %2, %cst {dimension_numbers = #tpu.dot_dimension_numbers<[1], [0], [0], [1], [0, 0, 1, 1], [], []>} : vector<8x1024xbf16>, vector<1024x512xbf16>, vector<8x512xf32> -> vector<8x512xf32>
    %c0_3 = arith.constant 0 : index
    %c0_4 = arith.constant 0 : index
    %4 = vector.load %arg3[%c0_3, %c0_4] : memref<1x512xf32, #tpu.memory_space<vmem>>, vector<1x512xf32>
    %5 = vector.broadcast %4 : vector<1x512xf32> to vector<8x512xf32>
    %6 = arith.addf %3, %5 : vector<8x512xf32>
    %cst_5 = arith.constant 0.000000e+00 : f32
    %7 = vector.broadcast %cst_5 : f32 to vector<8x512xf32>
    %8 = arith.maximumf %6, %7 : vector<8x512xf32>
    %c0_6 = arith.constant 0 : index
    %c0_7 = arith.constant 0 : index
    %9 = vector.load %arg4[%c0_6, %c0_7] : memref<1x512xf32, #tpu.memory_space<vmem>>, vector<1x512xf32>
    %c0_8 = arith.constant 0 : index
    %c0_9 = arith.constant 0 : index
    %10 = vector.load %arg5[%c0_8, %c0_9] : memref<1x512xf32, #tpu.memory_space<vmem>>, vector<1x512xf32>
    %cst_10 = arith.constant dense<0.000000e+00> : vector<8xf32>
    %11 = vector.multi_reduction <add>, %8, %cst_10 [1] : vector<8x512xf32> to vector<8xf32>
    %12 = vector.shape_cast %11 : vector<8xf32> to vector<8x1xf32>
    %cst_11 = arith.constant 5.120000e+02 : f32
    %13 = vector.broadcast %cst_11 : f32 to vector<8x1xf32>
    %14 = arith.divf %12, %13 : vector<8x1xf32>
    %15 = vector.broadcast %14 : vector<8x1xf32> to vector<8x512xf32>
    %16 = arith.subf %8, %15 : vector<8x512xf32>
    %17 = arith.mulf %16, %16 : vector<8x512xf32>
    %cst_12 = arith.constant dense<0.000000e+00> : vector<8xf32>
    %18 = vector.multi_reduction <add>, %17, %cst_12 [1] : vector<8x512xf32> to vector<8xf32>
    %19 = vector.shape_cast %18 : vector<8xf32> to vector<8x1xf32>
    %cst_13 = arith.constant 5.120000e+02 : f32
    %20 = vector.broadcast %cst_13 : f32 to vector<8x1xf32>
    %21 = arith.divf %19, %20 : vector<8x1xf32>
    %cst_14 = arith.constant 9.99999974E-6 : f32
    %22 = vector.broadcast %cst_14 : f32 to vector<8x1xf32>
    %23 = arith.addf %21, %22 : vector<8x1xf32>
    %24 = math.rsqrt %23 : vector<8x1xf32>
    %25 = vector.broadcast %24 : vector<8x1xf32> to vector<8x512xf32>
    %26 = arith.mulf %16, %25 : vector<8x512xf32>
    %27 = vector.broadcast %9 : vector<1x512xf32> to vector<8x512xf32>
    %28 = arith.mulf %26, %27 : vector<8x512xf32>
    %29 = vector.broadcast %10 : vector<1x512xf32> to vector<8x512xf32>
    %30 = arith.addf %28, %29 : vector<8x512xf32>
    %31 = arith.truncf %30 : vector<8x512xf32> to vector<8x512xbf16>
    %c0_15 = arith.constant 0 : index
    %c0_16 = arith.constant 0 : index
    %32 = vector.load %arg6[%c0_15, %c0_16] : memref<512x256xbf16, #tpu.memory_space<vmem>>, vector<512x256xbf16>
    %cst_17 = arith.constant dense<0.000000e+00> : vector<8x256xf32>
    %33 = tpu.matmul %31, %32, %cst_17 {dimension_numbers = #tpu.dot_dimension_numbers<[1], [0], [0], [1], [0, 0, 1, 1], [], []>} : vector<8x512xbf16>, vector<512x256xbf16>, vector<8x256xf32> -> vector<8x256xf32>
    %c0_18 = arith.constant 0 : index
    %c0_19 = arith.constant 0 : index
    %34 = vector.load %arg7[%c0_18, %c0_19] : memref<1x256xf32, #tpu.memory_space<vmem>>, vector<1x256xf32>
    %35 = vector.broadcast %34 : vector<1x256xf32> to vector<8x256xf32>
    %36 = arith.addf %33, %35 : vector<8x256xf32>
    %cst_20 = arith.constant 0.000000e+00 : f32
    %37 = vector.broadcast %cst_20 : f32 to vector<8x256xf32>
    %38 = arith.maximumf %36, %37 : vector<8x256xf32>
    %c0_21 = arith.constant 0 : index
    %c0_22 = arith.constant 0 : index
    %39 = vector.load %arg8[%c0_21, %c0_22] : memref<1x256xf32, #tpu.memory_space<vmem>>, vector<1x256xf32>
    %c0_23 = arith.constant 0 : index
    %c0_24 = arith.constant 0 : index
    %40 = vector.load %arg9[%c0_23, %c0_24] : memref<1x256xf32, #tpu.memory_space<vmem>>, vector<1x256xf32>
    %cst_25 = arith.constant dense<0.000000e+00> : vector<8xf32>
    %41 = vector.multi_reduction <add>, %38, %cst_25 [1] : vector<8x256xf32> to vector<8xf32>
    %42 = vector.shape_cast %41 : vector<8xf32> to vector<8x1xf32>
    %cst_26 = arith.constant 2.560000e+02 : f32
    %43 = vector.broadcast %cst_26 : f32 to vector<8x1xf32>
    %44 = arith.divf %42, %43 : vector<8x1xf32>
    %45 = vector.broadcast %44 : vector<8x1xf32> to vector<8x256xf32>
    %46 = arith.subf %38, %45 : vector<8x256xf32>
    %47 = arith.mulf %46, %46 : vector<8x256xf32>
    %cst_27 = arith.constant dense<0.000000e+00> : vector<8xf32>
    %48 = vector.multi_reduction <add>, %47, %cst_27 [1] : vector<8x256xf32> to vector<8xf32>
    %49 = vector.shape_cast %48 : vector<8xf32> to vector<8x1xf32>
    %cst_28 = arith.constant 2.560000e+02 : f32
    %50 = vector.broadcast %cst_28 : f32 to vector<8x1xf32>
    %51 = arith.divf %49, %50 : vector<8x1xf32>
    %cst_29 = arith.constant 9.99999974E-6 : f32
    %52 = vector.broadcast %cst_29 : f32 to vector<8x1xf32>
    %53 = arith.addf %51, %52 : vector<8x1xf32>
    %54 = math.rsqrt %53 : vector<8x1xf32>
    %55 = vector.broadcast %54 : vector<8x1xf32> to vector<8x256xf32>
    %56 = arith.mulf %46, %55 : vector<8x256xf32>
    %57 = vector.broadcast %39 : vector<1x256xf32> to vector<8x256xf32>
    %58 = arith.mulf %56, %57 : vector<8x256xf32>
    %59 = vector.broadcast %40 : vector<1x256xf32> to vector<8x256xf32>
    %60 = arith.addf %58, %59 : vector<8x256xf32>
    %61 = arith.truncf %60 : vector<8x256xf32> to vector<8x256xbf16>
    %c0_30 = arith.constant 0 : index
    %c0_31 = arith.constant 0 : index
    %62 = vector.load %arg10[%c0_30, %c0_31] : memref<256x128xbf16, #tpu.memory_space<vmem>>, vector<256x128xbf16>
    %cst_32 = arith.constant dense<0.000000e+00> : vector<8x128xf32>
    %63 = tpu.matmul %61, %62, %cst_32 {dimension_numbers = #tpu.dot_dimension_numbers<[1], [0], [0], [1], [0, 0, 1, 1], [], []>} : vector<8x256xbf16>, vector<256x128xbf16>, vector<8x128xf32> -> vector<8x128xf32>
    %c0_33 = arith.constant 0 : index
    %c0_34 = arith.constant 0 : index
    %64 = vector.load %arg11[%c0_33, %c0_34] : memref<1x128xf32, #tpu.memory_space<vmem>>, vector<1x128xf32>
    %65 = vector.broadcast %64 : vector<1x128xf32> to vector<8x128xf32>
    %66 = arith.addf %63, %65 : vector<8x128xf32>
    %67 = math.tanh %66 : vector<8x128xf32>
    %68 = arith.truncf %67 : vector<8x128xf32> to vector<8x128xbf16>
    %c0_35 = arith.constant 0 : index
    %c0_36 = arith.constant 0 : index
    %69 = vector.load %arg12[%c0_35, %c0_36] : memref<128x128xbf16, #tpu.memory_space<vmem>>, vector<128x128xbf16>
    %cst_37 = arith.constant dense<0.000000e+00> : vector<8x128xf32>
    %70 = tpu.matmul %68, %69, %cst_37 {dimension_numbers = #tpu.dot_dimension_numbers<[1], [0], [0], [1], [0, 0, 1, 1], [], []>} : vector<8x128xbf16>, vector<128x128xbf16>, vector<8x128xf32> -> vector<8x128xf32>
    %c0_38 = arith.constant 0 : index
    %c0_39 = arith.constant 0 : index
    %71 = vector.load %arg13[%c0_38, %c0_39] : memref<1x128xf32, #tpu.memory_space<vmem>>, vector<1x128xf32>
    %72 = vector.broadcast %71 : vector<1x128xf32> to vector<8x128xf32>
    %73 = arith.addf %70, %72 : vector<8x128xf32>
    %74 = math.tanh %73 : vector<8x128xf32>
    %c0_40 = arith.constant 0 : index
    %c0_41 = arith.constant 0 : index
    %75 = vector.load %arg14[%c0_40, %c0_41] : memref<8x128xf32, #tpu.memory_space<vmem>>, vector<8x128xf32>
    tpu.vector_store %arg14[%c0_40, %c0_41], %74 {strides = array<i32>} : memref<8x128xf32, #tpu.memory_space<vmem>>, vector<8x128xf32>,
    return
  }
  func.func @transform_0(%arg0: i32) -> (i32, i32) {
    %c0_i32 = arith.constant 0 : i32
    %c0_i32_0 = arith.constant 0 : i32
    return %arg0, %c0_i32 : i32, i32
  }
  func.func @transform_1(%arg0: i32) -> (i32, i32) {
    %c0_i32 = arith.constant 0 : i32
    %c0_i32_0 = arith.constant 0 : i32
    %c0_i32_1 = arith.constant 0 : i32
    return %c0_i32, %c0_i32_0 : i32, i32
  }
  func.func @transform_2(%arg0: i32) -> (i32, i32) {
    %c0_i32 = arith.constant 0 : i32
    %c0_i32_0 = arith.constant 0 : i32
    %c0_i32_1 = arith.constant 0 : i32
    return %c0_i32, %c0_i32_0 : i32, i32
  }
  func.func @transform_3(%arg0: i32) -> (i32, i32) {
    %c0_i32 = arith.constant 0 : i32
    %c0_i32_0 = arith.constant 0 : i32
    %c0_i32_1 = arith.constant 0 : i32
    return %c0_i32, %c0_i32_0 : i32, i32
  }
  func.func @transform_4(%arg0: i32) -> (i32, i32) {
    %c0_i32 = arith.constant 0 : i32
    %c0_i32_0 = arith.constant 0 : i32
    %c0_i32_1 = arith.constant 0 : i32
    return %c0_i32, %c0_i32_0 : i32, i32
  }
  func.func @transform_5(%arg0: i32) -> (i32, i32) {
    %c0_i32 = arith.constant 0 : i32
    %c0_i32_0 = arith.constant 0 : i32
    %c0_i32_1 = arith.constant 0 : i32
    return %c0_i32, %c0_i32_0 : i32, i32
  }
  func.func @transform_6(%arg0: i32) -> (i32, i32) {
    %c0_i32 = arith.constant 0 : i32
    %c0_i32_0 = arith.constant 0 : i32
    %c0_i32_1 = arith.constant 0 : i32
    return %c0_i32, %c0_i32_0 : i32, i32
  }
  func.func @transform_7(%arg0: i32) -> (i32, i32) {
    %c0_i32 = arith.constant 0 : i32
    %c0_i32_0 = arith.constant 0 : i32
    %c0_i32_1 = arith.constant 0 : i32
    return %c0_i32, %c0_i32_0 : i32, i32
  }
  func.func @transform_8(%arg0: i32) -> (i32, i32) {
    %c0_i32 = arith.constant 0 : i32
    %c0_i32_0 = arith.constant 0 : i32
    %c0_i32_1 = arith.constant 0 : i32
    return %c0_i32, %c0_i32_0 : i32, i32
  }
  func.func @transform_9(%arg0: i32) -> (i32, i32) {
    %c0_i32 = arith.constant 0 : i32
    %c0_i32_0 = arith.constant 0 : i32
    %c0_i32_1 = arith.constant 0 : i32
    return %c0_i32, %c0_i32_0 : i32, i32
  }
  func.func @transform_10(%arg0: i32) -> (i32, i32) {
    %c0_i32 = arith.constant 0 : i32
    %c0_i32_0 = arith.constant 0 : i32
    %c0_i32_1 = arith.constant 0 : i32
    return %c0_i32, %c0_i32_0 : i32, i32
  }
  func.func @transform_11(%arg0: i32) -> (i32, i32) {
    %c0_i32 = arith.constant 0 : i32
    %c0_i32_0 = arith.constant 0 : i32
    %c0_i32_1 = arith.constant 0 : i32
    return %c0_i32, %c0_i32_0 : i32, i32
  }
  func.func @transform_12(%arg0: i32) -> (i32, i32) {
    %c0_i32 = arith.constant 0 : i32
    %c0_i32_0 = arith.constant 0 : i32
    %c0_i32_1 = arith.constant 0 : i32
    return %c0_i32, %c0_i32_0 : i32, i32
  }
  func.func @transform_13(%arg0: i32) -> (i32, i32) {
    %c0_i32 = arith.constant 0 : i32
    %c0_i32_0 = arith.constant 0 : i32
    return %arg0, %c0_i32 : i32, i32
  }
}

</mosaic_0001>

<llo_original>
// kernel: geo_head_forward.1
$region0: #{geo_head_forward.1}
  #allocation0 [shape = 'u32[]', space=smem, size = 0x4, offset = 0x4, fixed_abs, tag = 'smem constant byte address 0x4 - core index']
  #allocation1 [shape = 'u32[144,128]{1,0:T(1,128)}', space=vmem, size = 0x12000, scoped, tag = 'internal scratch']
  %s0 = inlined_call_operand.hbm [shape: f32[8,1024], index: 0, kind: input, shape index: {}]
  %s1 = inlined_call_operand.hbm [shape: bf16[1024,512], index: 1, kind: input, shape index: {}]
  %s2 = inlined_call_operand.hbm [shape: f32[1,512], index: 2, kind: input, shape index: {}]
  %s3 = inlined_call_operand.vmem [shape: f32[1,512], index: 3, kind: input, shape index: {}]
  %s4 = inlined_call_operand.vmem [shape: f32[1,512], index: 4, kind: input, shape index: {}]
  %s5 = inlined_call_operand.hbm [shape: bf16[512,256], index: 5, kind: input, shape index: {}]
  %s6 = inlined_call_operand.hbm [shape: f32[1,256], index: 6, kind: input, shape index: {}]
  %s7 = inlined_call_operand.vmem [shape: f32[1,256], index: 7, kind: input, shape index: {}]
  %s8 = inlined_call_operand.hbm [shape: f32[1,256], index: 8, kind: input, shape index: {}]
  %s9 = inlined_call_operand.hbm [shape: bf16[256,128], index: 9, kind: input, shape index: {}]
  %s10 = inlined_call_operand.hbm [shape: f32[1,128], index: 10, kind: input, shape index: {}]
  %s11 = inlined_call_operand.hbm [shape: bf16[128,128], index: 11, kind: input, shape index: {}]
  %s12 = inlined_call_operand.hbm [shape: f32[1,128], index: 12, kind: input, shape index: {}]
  %s13 = inlined_call_operand.vmem [shape: f32[8,128], index: 13, kind: output, shape index: {}]
  %s14 = sld [smem:[#allocation0]]
  $region102: #{geo_head_forward.1} parent=0
    _
  %s16 = ssub.s32 1, %s14
  %s17 = scalar_select 0, %s16, %s14
  $region1: #{geo_head_forward.1} parent=0
    #allocation2 [shape = 'u8[32768]{0}', space=vmem, size = 0x8000, scoped, tag = 'input window, operand 0, single buffered']
    #allocation3 [shape = 's32[1]{0}', space=sflag, size = 0x4, scoped, tag = 'scoped memory for geo_head_forward.1']
    #allocation4 [shape = 'u8[1048576]{0}', space=vmem, size = 0x100000, scoped, tag = 'input window, operand 1, single buffered']
    #allocation5 [shape = 's32[1]{0}', space=sflag, size = 0x4, scoped, tag = 'scoped memory for geo_head_forward.1']
    #allocation6 [shape = 'u8[2048]{0}', space=vmem, size = 0x800, scoped, tag = 'input window, operand 2, single buffered']
    #allocation7 [shape = 'u8[262144]{0}', space=vmem, size = 0x40000, scoped, tag = 'input window, operand 5, single buffered']
    #allocation8 [shape = 's32[1]{0}', space=sflag, size = 0x4, scoped, tag = 'scoped memory for geo_head_forward.1']
    #allocation9 [shape = 'u8[1024]{0}', space=vmem, size = 0x400, scoped, tag = 'input window, operand 6, single buffered']
    #allocation10 [shape = 'u8[1024]{0}', space=vmem, size = 0x400, scoped, tag = 'input window, operand 8, single buffered']
    #allocation11 [shape = 's32[1]{0}', space=sflag, size = 0x4, scoped, tag = 'scoped memory for geo_head_forward.1']
    #allocation12 [shape = 'u8[65536]{0}', space=vmem, size = 0x10000, scoped, tag = 'input window, operand 9, single buffered']
    #allocation13 [shape = 'u8[512]{0}', space=vmem, size = 0x400, scoped, tag = 'input window, operand 10, single buffered']
    #allocation14 [shape = 's32[1]{0}', space=sflag, size = 0x4, scoped, tag = 'scoped memory for geo_head_forward.1']
    #allocation15 [shape = 'u8[32768]{0}', space=vmem, size = 0x8000, scoped, tag = 'input window, operand 11, single buffered']
    #allocation16 [shape = 'u8[512]{0}', space=vmem, size = 0x400, scoped, tag = 'input window, operand 12, single buffered']
    #allocation17 [shape = 's32[1]{0}', space=sflag, size = 0x4, scoped, tag = 'scoped memory for geo_head_forward.1']
    %18 = vsyncpa [#allocation3], 0
    %19 = vsyncpa [#allocation5], 0
    %20 = vsyncpa [#allocation8], 0
    %21 = vsyncpa [#allocation11], 0
    %22 = vsyncpa [#allocation14], 0
    %23 = vsyncpa [#allocation17], 0
    // Predicated region
    $region2: #{geo_head_forward.1} parent=1 // pred_check
      _
    $region3: #{geo_head_forward.1} parent=1 // pred_check_branch
      %25 = sbr.rel (0) target = $region5
    $region4: #{geo_head_forward.1} parent=1 // pred_region
      %s27 = ssub.s32 1024, 1024
      %28 = vsyncadd [#allocation3], %s27
      %s30 = sshll.u32 [#allocation2], 4
      %s31 = int_to_ptr.vmem [resolvable:$true] %s30
      %33 = dma.hbm_to_vmem [thread:$0]  %s0, 1024, %s31, [#allocation3]
    $region5: #{geo_head_forward.1} parent=1 // pred_fallthru
      _
    // Predicated region
    $region6: #{geo_head_forward.1} parent=1 // pred_check
      _
    $region7: #{geo_head_forward.1} parent=1 // pred_check_branch
      %35 = sbr.rel (0) target = $region9
    $region8: #{geo_head_forward.1} parent=1 // pred_region
      %s37 = ssub.s32 32768, 32768
      %38 = vsyncadd [#allocation5], %s37
      %s39 = sshll.u32 [#allocation4], 4
      %s40 = int_to_ptr.vmem [resolvable:$true] %s39
      %45 = dma.hbm_to_vmem [thread:$0]  %s1, 32768, %s40, [#allocation5], 256, 256, 16
    $region9: #{geo_head_forward.1} parent=1 // pred_fallthru
      _
    // Predicated region
    $region10: #{geo_head_forward.1} parent=1 // pred_check
      _
    $region11: #{geo_head_forward.1} parent=1 // pred_check_branch
      %47 = sbr.rel (0) target = $region13
    $region12: #{geo_head_forward.1} parent=1 // pred_region
      %s49 = ssub.s32 64, 64
      %50 = vsyncadd [#allocation5], %s49
      %s52 = sshll.u32 [#allocation6], 4
      %s53 = int_to_ptr.vmem [resolvable:$true] %s52
      %55 = dma.hbm_to_vmem [thread:$0]  %s2, 64, %s53, [#allocation5]
    $region13: #{geo_head_forward.1} parent=1 // pred_fallthru
      _
    // Predicated region
    $region14: #{geo_head_forward.1} parent=1 // pred_check
      _
    $region15: #{geo_head_forward.1} parent=1 // pred_check_branch
      %57 = sbr.rel (0) target = $region17
    $region16: #{geo_head_forward.1} parent=1 // pred_region
      _
    $region17: #{geo_head_forward.1} parent=1 // pred_fallthru
      _
    // Predicated region
    $region18: #{geo_head_forward.1} parent=1 // pred_check
      _
    $region19: #{geo_head_forward.1} parent=1 // pred_check_branch
      %59 = sbr.rel (0) target = $region21
    $region20: #{geo_head_forward.1} parent=1 // pred_region
      _
    $region21: #{geo_head_forward.1} parent=1 // pred_fallthru
      _
    // Predicated region
    $region22: #{geo_head_forward.1} parent=1 // pred_check
      _
    $region23: #{geo_head_forward.1} parent=1 // pred_check_branch
      %61 = sbr.rel (0) target = $region25
    $region24: #{geo_head_forward.1} parent=1 // pred_region
      %s63 = ssub.s32 8192, 8192
      %64 = vsyncadd [#allocation8], %s63
      %s65 = sshll.u32 [#allocation7], 4
      %s66 = int_to_ptr.vmem [resolvable:$true] %s65
      %71 = dma.hbm_to_vmem [thread:$0]  %s5, 8192, %s66, [#allocation8], 128, 128, 8
    $region25: #{geo_head_forward.1} parent=1 // pred_fallthru
      _
    // Predicated region
    $region26: #{geo_head_forward.1} parent=1 // pred_check
      _
    $region27: #{geo_head_forward.1} parent=1 // pred_check_branch
      %73 = sbr.rel (0) target = $region29
    $region28: #{geo_head_forward.1} parent=1 // pred_region
      %s75 = ssub.s32 32, 32
      %76 = vsyncadd [#allocation8], %s75
      %s78 = sshll.u32 [#allocation9], 4
      %s79 = int_to_ptr.vmem [resolvable:$true] %s78
      %81 = dma.hbm_to_vmem [thread:$0]  %s6, 32, %s79, [#allocation8]
    $region29: #{geo_head_forward.1} parent=1 // pred_fallthru
      _
    // Predicated region
    $region30: #{geo_head_forward.1} parent=1 // pred_check
      _
    $region31: #{geo_head_forward.1} parent=1 // pred_check_branch
      %83 = sbr.rel (0) target = $region33
    $region32: #{geo_head_forward.1} parent=1 // pred_region
      _
    $region33: #{geo_head_forward.1} parent=1 // pred_fallthru
      _
    // Predicated region
    $region34: #{geo_head_forward.1} parent=1 // pred_check
      _
    $region35: #{geo_head_forward.1} parent=1 // pred_check_branch
      %85 = sbr.rel (0) target = $region37
    $region36: #{geo_head_forward.1} parent=1 // pred_region
      %s87 = ssub.s32 32, 32
      %88 = vsyncadd [#allocation11], %s87
      %s90 = sshll.u32 [#allocation10], 4
      %s91 = int_to_ptr.vmem [resolvable:$true] %s90
      %93 = dma.hbm_to_vmem [thread:$0]  %s8, 32, %s91, [#allocation11]
    $region37: #{geo_head_forward.1} parent=1 // pred_fallthru
      _
    // Predicated region
    $region38: #{geo_head_forward.1} parent=1 // pred_check
      _
    $region39: #{geo_head_forward.1} parent=1 // pred_check_branch
      %95 = sbr.rel (0) target = $region41
    $region40: #{geo_head_forward.1} parent=1 // pred_region
      %s97 = ssub.s32 2048, 2048
      %98 = vsyncadd [#allocation11], %s97
      %s99 = sshll.u32 [#allocation12], 4
      %s100 = int_to_ptr.vmem [resolvable:$true] %s99
      %105 = dma.hbm_to_vmem [thread:$0]  %s9, 2048, %s100, [#allocation11], 64, 64, 4
    $region41: #{geo_head_forward.1} parent=1 // pred_fallthru
      _
    // Predicated region
    $region42: #{geo_head_forward.1} parent=1 // pred_check
      _
    $region43: #{geo_head_forward.1} parent=1 // pred_check_branch
      %107 = sbr.rel (0) target = $region45
    $region44: #{geo_head_forward.1} parent=1 // pred_region
      %s109 = ssub.s32 16, 16
      %110 = vsyncadd [#allocation14], %s109
      %s112 = sshll.u32 [#allocation13], 4
      %s113 = int_to_ptr.vmem [resolvable:$true] %s112
      %115 = dma.hbm_to_vmem [thread:$0]  %s10, 16, %s113, [#allocation14]
    $region45: #{geo_head_forward.1} parent=1 // pred_fallthru
      _
    // Predicated region
    $region46: #{geo_head_forward.1} parent=1 // pred_check
      _
    $region47: #{geo_head_forward.1} parent=1 // pred_check_branch
      %117 = sbr.rel (0) target = $region49
    $region48: #{geo_head_forward.1} parent=1 // pred_region
      %s119 = ssub.s32 1024, 1024
      %120 = vsyncadd [#allocation14], %s119
      %s121 = sshll.u32 [#allocation15], 4
      %s122 = int_to_ptr.vmem [resolvable:$true] %s121
      %127 = dma.hbm_to_vmem [thread:$0]  %s11, 1024, %s122, [#allocation14], 64, 64, 4
    $region49: #{geo_head_forward.1} parent=1 // pred_fallthru
      _
    // Predicated region
    $region50: #{geo_head_forward.1} parent=1 // pred_check
      _
    $region51: #{geo_head_forward.1} parent=1 // pred_check_branch
      %129 = sbr.rel (0) target = $region53
    $region52: #{geo_head_forward.1} parent=1 // pred_region
      %s131 = ssub.s32 16, 16
      %132 = vsyncadd [#allocation17], %s131
      %s134 = sshll.u32 [#allocation16], 4
      %s135 = int_to_ptr.vmem [resolvable:$true] %s134
      %137 = dma.hbm_to_vmem [thread:$0]  %s12, 16, %s135, [#allocation17]
    $region53: #{geo_head_forward.1} parent=1 // pred_fallthru
      _
    // Predicated region
    $region54: #{geo_head_forward.1} parent=1 // pred_check
      _
    $region55: #{geo_head_forward.1} parent=1 // pred_check_branch
      %139 = sbr.rel (0) target = $region57
    $region56: #{geo_head_forward.1} parent=1 // pred_region
      %140 = dma.done [#allocation3], 1024
    $region57: #{geo_head_forward.1} parent=1 // pred_fallthru
      _
    // Predicated region
    $region58: #{geo_head_forward.1} parent=1 // pred_check
      _
    $region59: #{geo_head_forward.1} parent=1 // pred_check_branch
      %142 = sbr.rel (0) target = $region61
    $region60: #{geo_head_forward.1} parent=1 // pred_region
      %143 = dma.done [#allocation5], 32768
    $region61: #{geo_head_forward.1} parent=1 // pred_fallthru
      _
    // Predicated region
    $region62: #{geo_head_forward.1} parent=1 // pred_check
      _
    $region63: #{geo_head_forward.1} parent=1 // pred_check_branch
      %145 = sbr.rel (0) target = $region65
    $region64: #{geo_head_forward.1} parent=1 // pred_region
      %146 = dma.done [#allocation5], 64
    $region65: #{geo_head_forward.1} parent=1 // pred_fallthru
      _
    // Predicated region
    $region66: #{geo_head_forward.1} parent=1 // pred_check
      _
    $region67: #{geo_head_forward.1} parent=1 // pred_check_branch
      %148 = sbr.rel (0) target = $region69
    $region68: #{geo_head_forward.1} parent=1 // pred_region
      %149 = dma.done [#allocation8], 8192
    $region69: #{geo_head_forward.1} parent=1 // pred_fallthru
      _
    // Predicated region
    $region70: #{geo_head_forward.1} parent=1 // pred_check
      _
    $region71: #{geo_head_forward.1} parent=1 // pred_check_branch
      %151 = sbr.rel (0) target = $region73
    $region72: #{geo_head_forward.1} parent=1 // pred_region
      %152 = dma.done [#allocation8], 32
    $region73: #{geo_head_forward.1} parent=1 // pred_fallthru
      _
    // Predicated region
    $region74: #{geo_head_forward.1} parent=1 // pred_check
      _
    $region75: #{geo_head_forward.1} parent=1 // pred_check_branch
      %154 = sbr.rel (0) target = $region77
    $region76: #{geo_head_forward.1} parent=1 // pred_region
      %155 = dma.done [#allocation11], 32
    $region77: #{geo_head_forward.1} parent=1 // pred_fallthru
      _
    // Predicated region
    $region78: #{geo_head_forward.1} parent=1 // pred_check
      _
    $region79: #{geo_head_forward.1} parent=1 // pred_check_branch
      %157 = sbr.rel (0) target = $region81
    $region80: #{geo_head_forward.1} parent=1 // pred_region
      %158 = dma.done [#allocation11], 2048
    $region81: #{geo_head_forward.1} parent=1 // pred_fallthru
      _
    // Predicated region
    $region82: #{geo_head_forward.1} parent=1 // pred_check
      _
    $region83: #{geo_head_forward.1} parent=1 // pred_check_branch
      %160 = sbr.rel (0) target = $region85
    $region84: #{geo_head_forward.1} parent=1 // pred_region
      %161 = dma.done [#allocation14], 16
    $region85: #{geo_head_forward.1} parent=1 // pred_fallthru
      _
    // Predicated region
    $region86: #{geo_head_forward.1} parent=1 // pred_check
      _
    $region87: #{geo_head_forward.1} parent=1 // pred_check_branch
      %163 = sbr.rel (0) target = $region89
    $region88: #{geo_head_forward.1} parent=1 // pred_region
      %164 = dma.done [#allocation14], 1024
    $region89: #{geo_head_forward.1} parent=1 // pred_fallthru
      _
    // Predicated region
    $region90: #{geo_head_forward.1} parent=1 // pred_check
      _
    $region91: #{geo_head_forward.1} parent=1 // pred_check_branch
      %166 = sbr.rel (0) target = $region93
    $region92: #{geo_head_forward.1} parent=1 // pred_region
      %167 = dma.done [#allocation17], 16
    $region93: #{geo_head_forward.1} parent=1 // pred_fallthru
      _
    %v169 = vld [vmem:[#allocation2] sm:$0xff]
    %v170 = vld [vmem:[#allocation2 + $0x8] sm:$0xff]
    %v171 = vld [vmem:[#allocation2 + $0x10] sm:$0xff]
    %v172 = vld [vmem:[#allocation2 + $0x18] sm:$0xff]
    %v173 = vld [vmem:[#allocation2 + $0x20] sm:$0xff]
    %v174 = vld [vmem:[#allocation2 + $0x28] sm:$0xff]
    %v175 = vld [vmem:[#allocation2 + $0x30] sm:$0xff]
    %v176 = vld [vmem:[#allocation2 + $0x38] sm:$0xff]
    %v177 = vpack.c.bf16 %v169, %v169
    %v178 = vpack.c.bf16 %v170, %v170
    %v179 = vpack.c.bf16 %v171, %v171
    %v180 = vpack.c.bf16 %v172, %v172
    %v181 = vpack.c.bf16 %v173, %v173
    %v182 = vpack.c.bf16 %v174, %v174
    %v183 = vpack.c.bf16 %v175, %v175
    %v184 = vpack.c.bf16 %v176, %v176
    %v185 = vld [vmem:[#allocation4] sm:$0xff]
    %v186 = vld [vmem:[#allocation4 + $0x8] sm:$0xff]
    %v187 = vld [vmem:[#allocation4 + $0x10] sm:$0xff]
    %v188 = vld [vmem:[#allocation4 + $0x18] sm:$0xff]
    %v189 = vld [vmem:[#allocation4 + $0x20] sm:$0xff]
    %v190 = vld [vmem:[#allocation4 + $0x28] sm:$0xff]
    %v191 = vld [vmem:[#allocation4 + $0x30] sm:$0xff]
    %v192 = vld [vmem:[#allocation4 + $0x38] sm:$0xff]
    %v193 = vld [vmem:[#allocation4 + $0x40] sm:$0xff]
    %v194 = vld [vmem:[#allocation4 + $0x48] sm:$0xff]
    %v195 = vld [vmem:[#allocation4 + $0x50] sm:$0xff]
    %v196 = vld [vmem:[#allocation4 + $0x58] sm:$0xff]
    %v197 = vld [vmem:[#allocation4 + $0x60] sm:$0xff]
    %v198 = vld [vmem:[#allocation4 + $0x68] sm:$0xff]
    %v199 = vld [vmem:[#allocation4 + $0x70] sm:$0xff]
    %v200 = vld [vmem:[#allocation4 + $0x78] sm:$0xff]
    %v201 = vld [vmem:[#allocation4 + $0x80] sm:$0xff]
    %v202 = vld [vmem:[#allocation4 + $0x88] sm:$0xff]
    %v203 = vld [vmem:[#allocation4 + $0x90] sm:$0xff]
    %v204 = vld [vmem:[#allocation4 + $0x98] sm:$0xff]
    %v205 = vld [vmem:[#allocation4 + $0xa0] sm:$0xff]
    %v206 = vld [vmem:[#allocation4 + $0xa8] sm:$0xff]
    %v207 = vld [vmem:[#allocation4 + $0xb0] sm:$0xff]
    %v208 = vld [vmem:[#allocation4 + $0xb8] sm:$0xff]
    %v209 = vld [vmem:[#allocation4 + $0xc0] sm:$0xff]
    %v210 = vld [vmem:[#allocation4 + $0xc8] sm:$0xff]
    %v211 = vld [vmem:[#allocation4 + $0xd0] sm:$0xff]
    %v212 = vld [vmem:[#allocation4 + $0xd8] sm:$0xff]
    %v213 = vld [vmem:[#allocation4 + $0xe0] sm:$0xff]
    %v214 = vld [vmem:[#allocation4 + $0xe8] sm:$0xff]
    %v215 = vld [vmem:[#allocation4 + $0xf0] sm:$0xff]
    %v216 = vld [vmem:[#allocation4 + $0xf8] sm:$0xff]
    %v217 = vld [vmem:[#allocation4 + $0x100] sm:$0xff]
    %v218 = vld [vmem:[#allocation4 + $0x108] sm:$0xff]
    %v219 = vld [vmem:[#allocation4 + $0x110] sm:$0xff]
    %v220 = vld [vmem:[#allocation4 + $0x118] sm:$0xff]
    %v221 = vld [vmem:[#allocation4 + $0x120] sm:$0xff]
    %v222 = vld [vmem:[#allocation4 + $0x128] sm:$0xff]
    %v223 = vld [vmem:[#allocation4 + $0x130] sm:$0xff]
    %v224 = vld [vmem:[#allocation4 + $0x138] sm:$0xff]
    %v225 = vld [vmem:[#allocation4 + $0x140] sm:$0xff]
    %v226 = vld [vmem:[#allocation4 + $0x148] sm:$0xff]
    %v227 = vld [vmem:[#allocation4 + $0x150] sm:$0xff]
    %v228 = vld [vmem:[#allocation4 + $0x158] sm:$0xff]
    %v229 = vld [vmem:[#allocation4 + $0x160] sm:$0xff]
    %v230 = vld [vmem:[#allocation4 + $0x168] sm:$0xff]
    %v231 = vld [vmem:[#allocation4 + $0x170] sm:$0xff]
    %v232 = vld [vmem:[#allocation4 + $0x178] sm:$0xff]
    %v233 = vld [vmem:[#allocation4 + $0x180] sm:$0xff]
    %v234 = vld [vmem:[#allocation4 + $0x188] sm:$0xff]
    %v235 = vld [vmem:[#allocation4 + $0x190] sm:$0xff]
    %v236 = vld [vmem:[#allocation4 + $0x198] sm:$0xff]
    %v237 = vld [vmem:[#allocation4 + $0x1a0] sm:$0xff]
    %v238 = vld [vmem:[#allocation4 + $0x1a8] sm:$0xff]
    %v239 = vld [vmem:[#allocation4 + $0x1b0] sm:$0xff]
    %v240 = vld [vmem:[#allocation4 + $0x1b8] sm:$0xff]
    %v241 = vld [vmem:[#allocation4 + $0x1c0] sm:$0xff]
    %v242 = vld [vmem:[#allocation4 + $0x1c8] sm:$0xff]
    %v243 = vld [vmem:[#allocation4 + $0x1d0] sm:$0xff]
    %v244 = vld [vmem:[#allocation4 + $0x1d8] sm:$0xff]
    %v245 = vld [vmem:[#allocation4 + $0x1e0] sm:$0xff]
    %v246 = vld [vmem:[#allocation4 + $0x1e8] sm:$0xff]
    %v247 = vld [vmem:[#allocation4 + $0x1f0] sm:$0xff]
    %v248 = vld [vmem:[#allocation4 + $0x1f8] sm:$0xff]
    %v249 = vld [vmem:[#allocation4 + $0x200] sm:$0xff]
    %v250 = vld [vmem:[#allocation4 + $0x208] sm:$0xff]
    %v251 = vld [vmem:[#allocation4 + $0x210] sm:$0xff]
    %v252 = vld [vmem:[#allocation4 + $0x218] sm:$0xff]
    %v253 = vld [vmem:[#allocation4 + $0x220] sm:$0xff]
    %v254 = vld [vmem:[#allocation4 + $0x228] sm:$0xff]
    %v255 = vld [vmem:[#allocation4 + $0x230] sm:$0xff]
    %v256 = vld [vmem:[#allocation4 + $0x238] sm:$0xff]
    %v257 = vld [vmem:[#allocation4 + $0x240] sm:$0xff]
    %v258 = vld [vmem:[#allocation4 + $0x248] sm:$0xff]
    %v259 = vld [vmem:[#allocation4 + $0x250] sm:$0xff]
    %v260 = vld [vmem:[#allocation4 + $0x258] sm:$0xff]
    %v261 = vld [vmem:[#allocation4 + $0x260] sm:$0xff]
    %v262 = vld [vmem:[#allocation4 + $0x268] sm:$0xff]
    %v263 = vld [vmem:[#allocation4 + $0x270] sm:$0xff]
    %v264 = vld [vmem:[#allocation4 + $0x278] sm:$0xff]
    %v265 = vld [vmem:[#allocation4 + $0x280] sm:$0xff]
    %v266 = vld [vmem:[#allocation4 + $0x288] sm:$0xff]
    %v267 = vld [vmem:[#allocation4 + $0x290] sm:$0xff]
    %v268 = vld [vmem:[#allocation4 + $0x298] sm:$0xff]
    %v269 = vld [vmem:[#allocation4 + $0x2a0] sm:$0xff]
    %v270 = vld [vmem:[#allocation4 + $0x2a8] sm:$0xff]
    %v271 = vld [vmem:[#allocation4 + $0x2b0] sm:$0xff]
    %v272 = vld [vmem:[#allocation4 + $0x2b8] sm:$0xff]
    %v273 = vld [vmem:[#allocation4 + $0x2c0] sm:$0xff]
    %v274 = vld [vmem:[#allocation4 + $0x2c8] sm:$0xff]
    %v275 = vld [vmem:[#allocation4 + $0x2d0] sm:$0xff]
    %v276 = vld [vmem:[#allocation4 + $0x2d8] sm:$0xff]
    %v277 = vld [vmem:[#allocation4 + $0x2e0] sm:$0xff]
    %v278 = vld [vmem:[#allocation4 + $0x2e8] sm:$0xff]
    %v279 = vld [vmem:[#allocation4 + $0x2f0] sm:$0xff]
    %v280 = vld [vmem:[#allocation4 + $0x2f8] sm:$0xff]
    %v281 = vld [vmem:[#allocation4 + $0x300] sm:$0xff]
    %v282 = vld [vmem:[#allocation4 + $0x308] sm:$0xff]
    %v283 = vld [vmem:[#allocation4 + $0x310] sm:$0xff]
    %v284 = vld [vmem:[#allocation4 + $0x318] sm:$0xff]
    %v285 = vld [vmem:[#allocation4 + $0x320] sm:$0xff]
    %v286 = vld [vmem:[#allocation4 + $0x328] sm:$0xff]
    %v287 = vld [vmem:[#allocation4 + $0x330] sm:$0xff]
    %v288 = vld [vmem:[#allocation4 + $0x338] sm:$0xff]
    %v289 = vld [vmem:[#allocation4 + $0x340] sm:$0xff]
    %v290 = vld [vmem:[#allocation4 + $0x348] sm:$0xff]
    %v291 = vld [vmem:[#allocation4 + $0x350] sm:$0xff]
    %v292 = vld [vmem:[#allocation4 + $0x358] sm:$0xff]
    %v293 = vld [vmem:[#allocation4 + $0x360] sm:$0xff]
    %v294 = vld [vmem:[#allocation4 + $0x368] sm:$0xff]
    %v295 = vld [vmem:[#allocation4 + $0x370] sm:$0xff]
    %v296 = vld [vmem:[#allocation4 + $0x378] sm:$0xff]
    %v297 = vld [vmem:[#allocation4 + $0x380] sm:$0xff]
    %v298 = vld [vmem:[#allocation4 + $0x388] sm:$0xff]
    %v299 = vld [vmem:[#allocation4 + $0x390] sm:$0xff]
    %v300 = vld [vmem:[#allocation4 + $0x398] sm:$0xff]
    %v301 = vld [vmem:[#allocation4 + $0x3a0] sm:$0xff]
    %v302 = vld [vmem:[#allocation4 + $0x3a8] sm:$0xff]
    %v303 = vld [vmem:[#allocation4 + $0x3b0] sm:$0xff]
    %v304 = vld [vmem:[#allocation4 + $0x3b8] sm:$0xff]
    %v305 = vld [vmem:[#allocation4 + $0x3c0] sm:$0xff]
    %v306 = vld [vmem:[#allocation4 + $0x3c8] sm:$0xff]
    %v307 = vld [vmem:[#allocation4 + $0x3d0] sm:$0xff]
    %v308 = vld [vmem:[#allocation4 + $0x3d8] sm:$0xff]
    %v309 = vld [vmem:[#allocation4 + $0x3e0] sm:$0xff]
    %v310 = vld [vmem:[#allocation4 + $0x3e8] sm:$0xff]
    %v311 = vld [vmem:[#allocation4 + $0x3f0] sm:$0xff]
    %v312 = vld [vmem:[#allocation4 + $0x3f8] sm:$0xff]
    %v313 = vld [vmem:[#allocation4 + $0x400] sm:$0xff]
    %v314 = vld [vmem:[#allocation4 + $0x408] sm:$0xff]
    %v315 = vld [vmem:[#allocation4 + $0x410] sm:$0xff]
    %v316 = vld [vmem:[#allocation4 + $0x418] sm:$0xff]
    %v317 = vld [vmem:[#allocation4 + $0x420] sm:$0xff]
    %v318 = vld [vmem:[#allocation4 + $0x428] sm:$0xff]
    %v319 = vld [vmem:[#allocation4 + $0x430] sm:$0xff]
    %v320 = vld [vmem:[#allocation4 + $0x438] sm:$0xff]
    %v321 = vld [vmem:[#allocation4 + $0x440] sm:$0xff]
    %v322 = vld [vmem:[#allocation4 + $0x448] sm:$0xff]
    %v323 = vld [vmem:[#allocation4 + $0x450] sm:$0xff]
    %v324 = vld [vmem:[#allocation4 + $0x458] sm:$0xff]
    %v325 = vld [vmem:[#allocation4 + $0x460] sm:$0xff]
    %v326 = vld [vmem:[#allocation4 + $0x468] sm:$0xff]
    %v327 = vld [vmem:[#allocation4 + $0x470] sm:$0xff]
    %v328 = vld [vmem:[#allocation4 + $0x478] sm:$0xff]
    %v329 = vld [vmem:[#allocation4 + $0x480] sm:$0xff]
    %v330 = vld [vmem:[#allocation4 + $0x488] sm:$0xff]
    %v331 = vld [vmem:[#allocation4 + $0x490] sm:$0xff]
    %v332 = vld [vmem:[#allocation4 + $0x498] sm:$0xff]
    %v333 = vld [vmem:[#allocation4 + $0x4a0] sm:$0xff]
    %v334 = vld [vmem:[#allocation4 + $0x4a8] sm:$0xff]
    %v335 = vld [vmem:[#allocation4 + $0x4b0] sm:$0xff]
    %v336 = vld [vmem:[#allocation4 + $0x4b8] sm:$0xff]
    %v337 = vld [vmem:[#allocation4 + $0x4c0] sm:$0xff]
    %v338 = vld [vmem:[#allocation4 + $0x4c8] sm:$0xff]
    %v339 = vld [vmem:[#allocation4 + $0x4d0] sm:$0xff]
    %v340 = vld [vmem:[#allocation4 + $0x4d8] sm:$0xff]
    %v341 = vld [vmem:[#allocation4 + $0x4e0] sm:$0xff]
    %v342 = vld [vmem:[#allocation4 + $0x4e8] sm:$0xff]
    %v343 = vld [vmem:[#allocation4 + $0x4f0] sm:$0xff]
    %v344 = vld [vmem:[#allocation4 + $0x4f8] sm:$0xff]
    %v345 = vld [vmem:[#allocation4 + $0x500] sm:$0xff]
    %v346 = vld [vmem:[#allocation4 + $0x508] sm:$0xff]
    %v347 = vld [vmem:[#allocation4 + $0x510] sm:$0xff]
    %v348 = vld [vmem:[#allocation4 + $0x518] sm:$0xff]
    %v349 = vld [vmem:[#allocation4 + $0x520] sm:$0xff]
    %v350 = vld [vmem:[#allocation4 + $0x528] sm:$0xff]
    %v351 = vld [vmem:[#allocation4 + $0x530] sm:$0xff]
    %v352 = vld [vmem:[#allocation4 + $0x538] sm:$0xff]
    %v353 = vld [vmem:[#allocation4 + $0x540] sm:$0xff]
    %v354 = vld [vmem:[#allocation4 + $0x548] sm:$0xff]
    %v355 = vld [vmem:[#allocation4 + $0x550] sm:$0xff]
    %v356 = vld [vmem:[#allocation4 + $0x558] sm:$0xff]
    %v357 = vld [vmem:[#allocation4 + $0x560] sm:$0xff]
    %v358 = vld [vmem:[#allocation4 + $0x568] sm:$0xff]
    %v359 = vld [vmem:[#allocation4 + $0x570] sm:$0xff]
    %v360 = vld [vmem:[#allocation4 + $0x578] sm:$0xff]
    %v361 = vld [vmem:[#allocation4 + $0x580] sm:$0xff]
    %v362 = vld [vmem:[#allocation4 + $0x588] sm:$0xff]
    %v363 = vld [vmem:[#allocation4 + $0x590] sm:$0xff]
    %v364 = vld [vmem:[#allocation4 + $0x598] sm:$0xff]
    %v365 = vld [vmem:[#allocation4 + $0x5a0] sm:$0xff]
    %v366 = vld [vmem:[#allocation4 + $0x5a8] sm:$0xff]
    %v367 = vld [vmem:[#allocation4 + $0x5b0] sm:$0xff]
    %v368 = vld [vmem:[#allocation4 + $0x5b8] sm:$0xff]
    %v369 = vld [vmem:[#allocation4 + $0x5c0] sm:$0xff]
    %v370 = vld [vmem:[#allocation4 + $0x5c8] sm:$0xff]
    %v371 = vld [vmem:[#allocation4 + $0x5d0] sm:$0xff]
    %v372 = vld [vmem:[#allocation4 + $0x5d8] sm:$0xff]
    %v373 = vld [vmem:[#allocation4 + $0x5e0] sm:$0xff]
    %v374 = vld [vmem:[#allocation4 + $0x5e8] sm:$0xff]
    %v375 = vld [vmem:[#allocation4 + $0x5f0] sm:$0xff]
    %v376 = vld [vmem:[#allocation4 + $0x5f8] sm:$0xff]
    %v377 = vld [vmem:[#allocation4 + $0x600] sm:$0xff]
    %v378 = vld [vmem:[#allocation4 + $0x608] sm:$0xff]
    %v379 = vld [vmem:[#allocation4 + $0x610] sm:$0xff]
    %v380 = vld [vmem:[#allocation4 + $0x618] sm:$0xff]
    %v381 = vld [vmem:[#allocation4 + $0x620] sm:$0xff]
    %v382 = vld [vmem:[#allocation4 + $0x628] sm:$0xff]
    %v383 = vld [vmem:[#allocation4 + $0x630] sm:$0xff]
    %v384 = vld [vmem:[#allocation4 + $0x638] sm:$0xff]
    %v385 = vld [vmem:[#allocation4 + $0x640] sm:$0xff]
    %v386 = vld [vmem:[#allocation4 + $0x648] sm:$0xff]
    %v387 = vld [vmem:[#allocation4 + $0x650] sm:$0xff]
    %v388 = vld [vmem:[#allocation4 + $0x658] sm:$0xff]
    %v389 = vld [vmem:[#allocation4 + $0x660] sm:$0xff]
    %v390 = vld [vmem:[#allocation4 + $0x668] sm:$0xff]
    %v391 = vld [vmem:[#allocation4 + $0x670] sm:$0xff]
    %v392 = vld [vmem:[#allocation4 + $0x678] sm:$0xff]
    %v393 = vld [vmem:[#allocation4 + $0x680] sm:$0xff]
    %v394 = vld [vmem:[#allocation4 + $0x688] sm:$0xff]
    %v395 = vld [vmem:[#allocation4 + $0x690] sm:$0xff]
    %v396 = vld [vmem:[#allocation4 + $0x698] sm:$0xff]
    %v397 = vld [vmem:[#allocation4 + $0x6a0] sm:$0xff]
    %v398 = vld [vmem:[#allocation4 + $0x6a8] sm:$0xff]
    %v399 = vld [vmem:[#allocation4 + $0x6b0] sm:$0xff]
    %v400 = vld [vmem:[#allocation4 + $0x6b8] sm:$0xff]
    %v401 = vld [vmem:[#allocation4 + $0x6c0] sm:$0xff]
    %v402 = vld [vmem:[#allocation4 + $0x6c8] sm:$0xff]
    %v403 = vld [vmem:[#allocation4 + $0x6d0] sm:$0xff]
    %v404 = vld [vmem:[#allocation4 + $0x6d8] sm:$0xff]
    %v405 = vld [vmem:[#allocation4 + $0x6e0] sm:$0xff]
    %v406 = vld [vmem:[#allocation4 + $0x6e8] sm:$0xff]
    %v407 = vld [vmem:[#allocation4 + $0x6f0] sm:$0xff]
    %v408 = vld [vmem:[#allocation4 + $0x6f8] sm:$0xff]
    %v409 = vld [vmem:[#allocation4 + $0x700] sm:$0xff]
    %v410 = vld [vmem:[#allocation4 + $0x708] sm:$0xff]
    %v411 = vld [vmem:[#allocation4 + $0x710] sm:$0xff]
    %v412 = vld [vmem:[#allocation4 + $0x718] sm:$0xff]
    %v413 = vld [vmem:[#allocation4 + $0x720] sm:$0xff]
    %v414 = vld [vmem:[#allocation4 + $0x728] sm:$0xff]
    %v415 = vld [vmem:[#allocation4 + $0x730] sm:$0xff]
    %v416 = vld [vmem:[#allocation4 + $0x738] sm:$0xff]
    %v417 = vld [vmem:[#allocation4 + $0x740] sm:$0xff]
    %v418 = vld [vmem:[#allocation4 + $0x748] sm:$0xff]
    %v419 = vld [vmem:[#allocation4 + $0x750] sm:$0xff]
    %v420 = vld [vmem:[#allocation4 + $0x758] sm:$0xff]
    %v421 = vld [vmem:[#allocation4 + $0x760] sm:$0xff]
    %v422 = vld [vmem:[#allocation4 + $0x768] sm:$0xff]
    %v423 = vld [vmem:[#allocation4 + $0x770] sm:$0xff]
    %v424 = vld [vmem:[#allocation4 + $0x778] sm:$0xff]
    %v425 = vld [vmem:[#allocation4 + $0x780] sm:$0xff]
    %v426 = vld [vmem:[#allocation4 + $0x788] sm:$0xff]
    %v427 = vld [vmem:[#allocation4 + $0x790] sm:$0xff]
    %v428 = vld [vmem:[#allocation4 + $0x798] sm:$0xff]
    %v429 = vld [vmem:[#allocation4 + $0x7a0] sm:$0xff]
    %v430 = vld [vmem:[#allocation4 + $0x7a8] sm:$0xff]
    %v431 = vld [vmem:[#allocation4 + $0x7b0] sm:$0xff]
    %v432 = vld [vmem:[#allocation4 + $0x7b8] sm:$0xff]
    %v433 = vld [vmem:[#allocation4 + $0x7c0] sm:$0xff]
    %v434 = vld [vmem:[#allocation4 + $0x7c8] sm:$0xff]
    %v435 = vld [vmem:[#allocation4 + $0x7d0] sm:$0xff]
    %v436 = vld [vmem:[#allocation4 + $0x7d8] sm:$0xff]
    %v437 = vld [vmem:[#allocation4 + $0x7e0] sm:$0xff]
    %v438 = vld [vmem:[#allocation4 + $0x7e8] sm:$0xff]
    %v439 = vld [vmem:[#allocation4 + $0x7f0] sm:$0xff]
    %v440 = vld [vmem:[#allocation4 + $0x7f8] sm:$0xff]
    %v441 = vld [vmem:[#allocation6] sm:$0xf]
    %v443 = vlaneseq
    %v444 = vshrl.u32 %v443, 7
    %v445 = vsub.s32 0, %v444
    %v446 = vrot.slane %v441, %v445
    %v447 = vlaneseq
    %v448 = vshrl.u32 %v447, 7
    %v449 = vsub.s32 1, %v448
    %v450 = vrot.slane %v441, %v449
    %v451 = vlaneseq
    %v452 = vshrl.u32 %v451, 7
    %v453 = vsub.s32 2, %v452
    %v454 = vrot.slane %v441, %v453
    %v455 = vlaneseq
    %v456 = vshrl.u32 %v455, 7
    %v457 = vsub.s32 3, %v456
    %v458 = vrot.slane %v441, %v457
    %v719 = vunpack.c.l.b16 %v185
    %v720 = vunpack.c.h.b16 %v185
    %v721 = vunpack.c.l.b16 %v186
    %v722 = vunpack.c.h.b16 %v186
    %v723 = vunpack.c.l.b16 %v187
    %v724 = vunpack.c.h.b16 %v187
    %v725 = vunpack.c.l.b16 %v188
    %v726 = vunpack.c.h.b16 %v188
    %v727 = vunpack.c.l.b16 %v189
    %v728 = vunpack.c.h.b16 %v189
    %v729 = vunpack.c.l.b16 %v190
    %v730 = vunpack.c.h.b16 %v190
    %v731 = vunpack.c.l.b16 %v191
    %v732 = vunpack.c.h.b16 %v191
    %v733 = vunpack.c.l.b16 %v192
    %v734 = vunpack.c.h.b16 %v192
    %v735 = vunpack.c.l.b16 %v193
    %v736 = vunpack.c.h.b16 %v193
    %v737 = vunpack.c.l.b16 %v194
    %v738 = vunpack.c.h.b16 %v194
    %v739 = vunpack.c.l.b16 %v195
    %v740 = vunpack.c.h.b16 %v195
    %v741 = vunpack.c.l.b16 %v196
    %v742 = vunpack.c.h.b16 %v196
    %v743 = vunpack.c.l.b16 %v197
    %v744 = vunpack.c.h.b16 %v197
    %v745 = vunpack.c.l.b16 %v198
    %v746 = vunpack.c.h.b16 %v198
    %v747 = vunpack.c.l.b16 %v199
    %v748 = vunpack.c.h.b16 %v199
    %v749 = vunpack.c.l.b16 %v200
    %v750 = vunpack.c.h.b16 %v200
    %v751 = vunpack.c.l.b16 %v201
    %v752 = vunpack.c.h.b16 %v201
    %v753 = vunpack.c.l.b16 %v202
    %v754 = vunpack.c.h.b16 %v202
    %v755 = vunpack.c.l.b16 %v203
    %v756 = vunpack.c.h.b16 %v203
    %v757 = vunpack.c.l.b16 %v204
    %v758 = vunpack.c.h.b16 %v204
    %v759 = vunpack.c.l.b16 %v205
    %v760 = vunpack.c.h.b16 %v205
    %v761 = vunpack.c.l.b16 %v206
    %v762 = vunpack.c.h.b16 %v206
    %v763 = vunpack.c.l.b16 %v207
    %v764 = vunpack.c.h.b16 %v207
    %v765 = vunpack.c.l.b16 %v208
    %v766 = vunpack.c.h.b16 %v208
    %v767 = vunpack.c.l.b16 %v209
    %v768 = vunpack.c.h.b16 %v209
    %v769 = vunpack.c.l.b16 %v210
    %v770 = vunpack.c.h.b16 %v210
    %v771 = vunpack.c.l.b16 %v211
    %v772 = vunpack.c.h.b16 %v211
    %v773 = vunpack.c.l.b16 %v212
    %v774 = vunpack.c.h.b16 %v212
    %v775 = vunpack.c.l.b16 %v213
    %v776 = vunpack.c.h.b16 %v213
    %v777 = vunpack.c.l.b16 %v214
    %v778 = vunpack.c.h.b16 %v214
    %v779 = vunpack.c.l.b16 %v215
    %v780 = vunpack.c.h.b16 %v215
    %v781 = vunpack.c.l.b16 %v216
    %v782 = vunpack.c.h.b16 %v216
    %v783 = vunpack.c.l.b16 %v217
    %v784 = vunpack.c.h.b16 %v217
    %v785 = vunpack.c.l.b16 %v218
    %v786 = vunpack.c.h.b16 %v218
    %v787 = vunpack.c.l.b16 %v219
    %v788 = vunpack.c.h.b16 %v219
    %v789 = vunpack.c.l.b16 %v220
    %v790 = vunpack.c.h.b16 %v220
    %v791 = vunpack.c.l.b16 %v221
    %v792 = vunpack.c.h.b16 %v221
    %v793 = vunpack.c.l.b16 %v222
    %v794 = vunpack.c.h.b16 %v222
    %v795 = vunpack.c.l.b16 %v223
    %v796 = vunpack.c.h.b16 %v223
    %v797 = vunpack.c.l.b16 %v224
    %v798 = vunpack.c.h.b16 %v224
    %v799 = vunpack.c.l.b16 %v225
    %v800 = vunpack.c.h.b16 %v225
    %v801 = vunpack.c.l.b16 %v226
    %v802 = vunpack.c.h.b16 %v226
    %v803 = vunpack.c.l.b16 %v227
    %v804 = vunpack.c.h.b16 %v227
    %v805 = vunpack.c.l.b16 %v228
    %v806 = vunpack.c.h.b16 %v228
    %v807 = vunpack.c.l.b16 %v229
    %v808 = vunpack.c.h.b16 %v229
    %v809 = vunpack.c.l.b16 %v230
    %v810 = vunpack.c.h.b16 %v230
    %v811 = vunpack.c.l.b16 %v231
    %v812 = vunpack.c.h.b16 %v231
    %v813 = vunpack.c.l.b16 %v232
    %v814 = vunpack.c.h.b16 %v232
    %v815 = vunpack.c.l.b16 %v233
    %v816 = vunpack.c.h.b16 %v233
    %v817 = vunpack.c.l.b16 %v234
    %v818 = vunpack.c.h.b16 %v234
    %v819 = vunpack.c.l.b16 %v235
    %v820 = vunpack.c.h.b16 %v235
    %v821 = vunpack.c.l.b16 %v236
    %v822 = vunpack.c.h.b16 %v236
    %v823 = vunpack.c.l.b16 %v237
    %v824 = vunpack.c.h.b16 %v237
    %v825 = vunpack.c.l.b16 %v238
    %v826 = vunpack.c.h.b16 %v238
    %v827 = vunpack.c.l.b16 %v239
    %v828 = vunpack.c.h.b16 %v239
    %v829 = vunpack.c.l.b16 %v240
    %v830 = vunpack.c.h.b16 %v240
    %v831 = vunpack.c.l.b16 %v241
    %v832 = vunpack.c.h.b16 %v241
    %v833 = vunpack.c.l.b16 %v242
    %v834 = vunpack.c.h.b16 %v242
    %v835 = vunpack.c.l.b16 %v243
    %v836 = vunpack.c.h.b16 %v243
    %v837 = vunpack.c.l.b16 %v244
    %v838 = vunpack.c.h.b16 %v244
    %v839 = vunpack.c.l.b16 %v245
    %v840 = vunpack.c.h.b16 %v245
    %v841 = vunpack.c.l.b16 %v246
    %v842 = vunpack.c.h.b16 %v246
    %v843 = vunpack.c.l.b16 %v247
    %v844 = vunpack.c.h.b16 %v247
    %v845 = vunpack.c.l.b16 %v248
    %v846 = vunpack.c.h.b16 %v248
    %v847 = vunpack.c.l.b16 %v249
    %v848 = vunpack.c.h.b16 %v249
    %v849 = vunpack.c.l.b16 %v250
    %v850 = vunpack.c.h.b16 %v250
    %v851 = vunpack.c.l.b16 %v251
    %v852 = vunpack.c.h.b16 %v251
    %v853 = vunpack.c.l.b16 %v252
    %v854 = vunpack.c.h.b16 %v252
    %v855 = vunpack.c.l.b16 %v253
    %v856 = vunpack.c.h.b16 %v253
    %v857 = vunpack.c.l.b16 %v254
    %v858 = vunpack.c.h.b16 %v254
    %v859 = vunpack.c.l.b16 %v255
    %v860 = vunpack.c.h.b16 %v255
    %v861 = vunpack.c.l.b16 %v256
    %v862 = vunpack.c.h.b16 %v256
    %v863 = vunpack.c.l.b16 %v257
    %v864 = vunpack.c.h.b16 %v257
    %v865 = vunpack.c.l.b16 %v258
    %v866 = vunpack.c.h.b16 %v258
    %v867 = vunpack.c.l.b16 %v259
    %v868 = vunpack.c.h.b16 %v259
    %v869 = vunpack.c.l.b16 %v260
    %v870 = vunpack.c.h.b16 %v260
    %v871 = vunpack.c.l.b16 %v261
    %v872 = vunpack.c.h.b16 %v261
    %v873 = vunpack.c.l.b16 %v262
    %v874 = vunpack.c.h.b16 %v262
    %v875 = vunpack.c.l.b16 %v263
    %v876 = vunpack.c.h.b16 %v263
    %v877 = vunpack.c.l.b16 %v264
    %v878 = vunpack.c.h.b16 %v264
    %v879 = vunpack.c.l.b16 %v265
    %v880 = vunpack.c.h.b16 %v265
    %v881 = vunpack.c.l.b16 %v266
    %v882 = vunpack.c.h.b16 %v266
    %v883 = vunpack.c.l.b16 %v267
    %v884 = vunpack.c.h.b16 %v267
    %v885 = vunpack.c.l.b16 %v268
    %v886 = vunpack.c.h.b16 %v268
    %v887 = vunpack.c.l.b16 %v269
    %v888 = vunpack.c.h.b16 %v269
    %v889 = vunpack.c.l.b16 %v270
    %v890 = vunpack.c.h.b16 %v270
    %v891 = vunpack.c.l.b16 %v271
    %v892 = vunpack.c.h.b16 %v271
    %v893 = vunpack.c.l.b16 %v272
    %v894 = vunpack.c.h.b16 %v272
    %v895 = vunpack.c.l.b16 %v273
    %v896 = vunpack.c.h.b16 %v273
    %v897 = vunpack.c.l.b16 %v274
    %v898 = vunpack.c.h.b16 %v274
    %v899 = vunpack.c.l.b16 %v275
    %v900 = vunpack.c.h.b16 %v275
    %v901 = vunpack.c.l.b16 %v276
    %v902 = vunpack.c.h.b16 %v276
    %v903 = vunpack.c.l.b16 %v277
    %v904 = vunpack.c.h.b16 %v277
    %v905 = vunpack.c.l.b16 %v278
    %v906 = vunpack.c.h.b16 %v278
    %v907 = vunpack.c.l.b16 %v279
    %v908 = vunpack.c.h.b16 %v279
    %v909 = vunpack.c.l.b16 %v280
    %v910 = vunpack.c.h.b16 %v280
    %v911 = vunpack.c.l.b16 %v281
    %v912 = vunpack.c.h.b16 %v281
    %v913 = vunpack.c.l.b16 %v282
    %v914 = vunpack.c.h.b16 %v282
    %v915 = vunpack.c.l.b16 %v283
    %v916 = vunpack.c.h.b16 %v283
    %v917 = vunpack.c.l.b16 %v284
    %v918 = vunpack.c.h.b16 %v284
    %v919 = vunpack.c.l.b16 %v285
    %v920 = vunpack.c.h.b16 %v285
    %v921 = vunpack.c.l.b16 %v286
    %v922 = vunpack.c.h.b16 %v286
    %v923 = vunpack.c.l.b16 %v287
    %v924 = vunpack.c.h.b16 %v287
    %v925 = vunpack.c.l.b16 %v288
    %v926 = vunpack.c.h.b16 %v288
    %v927 = vunpack.c.l.b16 %v289
    %v928 = vunpack.c.h.b16 %v289
    %v929 = vunpack.c.l.b16 %v290
    %v930 = vunpack.c.h.b16 %v290
    %v931 = vunpack.c.l.b16 %v291
    %v932 = vunpack.c.h.b16 %v291
    %v933 = vunpack.c.l.b16 %v292
    %v934 = vunpack.c.h.b16 %v292
    %v935 = vunpack.c.l.b16 %v293
    %v936 = vunpack.c.h.b16 %v293
    %v937 = vunpack.c.l.b16 %v294
    %v938 = vunpack.c.h.b16 %v294
    %v939 = vunpack.c.l.b16 %v295
    %v940 = vunpack.c.h.b16 %v295
    %v941 = vunpack.c.l.b16 %v296
    %v942 = vunpack.c.h.b16 %v296
    %v943 = vunpack.c.l.b16 %v297
    %v944 = vunpack.c.h.b16 %v297
    %v945 = vunpack.c.l.b16 %v298
    %v946 = vunpack.c.h.b16 %v298
    %v947 = vunpack.c.l.b16 %v299
    %v948 = vunpack.c.h.b16 %v299
    %v949 = vunpack.c.l.b16 %v300
    %v950 = vunpack.c.h.b16 %v300
    %v951 = vunpack.c.l.b16 %v301
    %v952 = vunpack.c.h.b16 %v301
    %v953 = vunpack.c.l.b16 %v302
    %v954 = vunpack.c.h.b16 %v302
    %v955 = vunpack.c.l.b16 %v303
    %v956 = vunpack.c.h.b16 %v303
    %v957 = vunpack.c.l.b16 %v304
    %v958 = vunpack.c.h.b16 %v304
    %v959 = vunpack.c.l.b16 %v305
    %v960 = vunpack.c.h.b16 %v305
    %v961 = vunpack.c.l.b16 %v306
    %v962 = vunpack.c.h.b16 %v306
    %v963 = vunpack.c.l.b16 %v307
    %v964 = vunpack.c.h.b16 %v307
    %v965 = vunpack.c.l.b16 %v308
    %v966 = vunpack.c.h.b16 %v308
    %v967 = vunpack.c.l.b16 %v309
    %v968 = vunpack.c.h.b16 %v309
    %v969 = vunpack.c.l.b16 %v310
    %v970 = vunpack.c.h.b16 %v310
    %v971 = vunpack.c.l.b16 %v311
    %v972 = vunpack.c.h.b16 %v311
    %v973 = vunpack.c.l.b16 %v312
    %v974 = vunpack.c.h.b16 %v312
    %v975 = vunpack.c.l.b16 %v313
    %v976 = vunpack.c.h.b16 %v313
    %v977 = vunpack.c.l.b16 %v314
    %v978 = vunpack.c.h.b16 %v314
    %v979 = vunpack.c.l.b16 %v315
    %v980 = vunpack.c.h.b16 %v315
    %v981 = vunpack.c.l.b16 %v316
    %v982 = vunpack.c.h.b16 %v316
    %v983 = vunpack.c.l.b16 %v317
    %v984 = vunpack.c.h.b16 %v317
    %v985 = vunpack.c.l.b16 %v318
    %v986 = vunpack.c.h.b16 %v318
    %v987 = vunpack.c.l.b16 %v319
    %v988 = vunpack.c.h.b16 %v319
    %v989 = vunpack.c.l.b16 %v320
    %v990 = vunpack.c.h.b16 %v320
    %v991 = vunpack.c.l.b16 %v321
    %v992 = vunpack.c.h.b16 %v321
    %v993 = vunpack.c.l.b16 %v322
    %v994 = vunpack.c.h.b16 %v322
    %v995 = vunpack.c.l.b16 %v323
    %v996 = vunpack.c.h.b16 %v323
    %v997 = vunpack.c.l.b16 %v324
    %v998 = vunpack.c.h.b16 %v324
    %v999 = vunpack.c.l.b16 %v325
    %v1000 = vunpack.c.h.b16 %v325
    %v1001 = vunpack.c.l.b16 %v326
    %v1002 = vunpack.c.h.b16 %v326
    %v1003 = vunpack.c.l.b16 %v327
    %v1004 = vunpack.c.h.b16 %v327
    %v1005 = vunpack.c.l.b16 %v328
    %v1006 = vunpack.c.h.b16 %v328
    %v1007 = vunpack.c.l.b16 %v329
    %v1008 = vunpack.c.h.b16 %v329
    %v1009 = vunpack.c.l.b16 %v330
    %v1010 = vunpack.c.h.b16 %v330
    %v1011 = vunpack.c.l.b16 %v331
    %v1012 = vunpack.c.h.b16 %v331
    %v1013 = vunpack.c.l.b16 %v332
    %v1014 = vunpack.c.h.b16 %v332
    %v1015 = vunpack.c.l.b16 %v333
    %v1016 = vunpack.c.h.b16 %v333
    %v1017 = vunpack.c.l.b16 %v334
    %v1018 = vunpack.c.h.b16 %v334
    %v1019 = vunpack.c.l.b16 %v335
    %v1020 = vunpack.c.h.b16 %v335
    %v1021 = vunpack.c.l.b16 %v336
    %v1022 = vunpack.c.h.b16 %v336
    %v1023 = vunpack.c.l.b16 %v337
    %v1024 = vunpack.c.h.b16 %v337
    %v1025 = vunpack.c.l.b16 %v338
    %v1026 = vunpack.c.h.b16 %v338
    %v1027 = vunpack.c.l.b16 %v339
    %v1028 = vunpack.c.h.b16 %v339
    %v1029 = vunpack.c.l.b16 %v340
    %v1030 = vunpack.c.h.b16 %v340
    %v1031 = vunpack.c.l.b16 %v341
    %v1032 = vunpack.c.h.b16 %v341
    %v1033 = vunpack.c.l.b16 %v342
    %v1034 = vunpack.c.h.b16 %v342
    %v1035 = vunpack.c.l.b16 %v343
    %v1036 = vunpack.c.h.b16 %v343
    %v1037 = vunpack.c.l.b16 %v344
    %v1038 = vunpack.c.h.b16 %v344
    %v1039 = vunpack.c.l.b16 %v345
    %v1040 = vunpack.c.h.b16 %v345
    %v1041 = vunpack.c.l.b16 %v346
    %v1042 = vunpack.c.h.b16 %v346
    %v1043 = vunpack.c.l.b16 %v347
    %v1044 = vunpack.c.h.b16 %v347
    %v1045 = vunpack.c.l.b16 %v348
    %v1046 = vunpack.c.h.b16 %v348
    %v1047 = vunpack.c.l.b16 %v349
    %v1048 = vunpack.c.h.b16 %v349
    %v1049 = vunpack.c.l.b16 %v350
    %v1050 = vunpack.c.h.b16 %v350
    %v1051 = vunpack.c.l.b16 %v351
    %v1052 = vunpack.c.h.b16 %v351
    %v1053 = vunpack.c.l.b16 %v352
    %v1054 = vunpack.c.h.b16 %v352
    %v1055 = vunpack.c.l.b16 %v353
    %v1056 = vunpack.c.h.b16 %v353
    %v1057 = vunpack.c.l.b16 %v354
    %v1058 = vunpack.c.h.b16 %v354
    %v1059 = vunpack.c.l.b16 %v355
    %v1060 = vunpack.c.h.b16 %v355
    %v1061 = vunpack.c.l.b16 %v356
    %v1062 = vunpack.c.h.b16 %v356
    %v1063 = vunpack.c.l.b16 %v357
    %v1064 = vunpack.c.h.b16 %v357
    %v1065 = vunpack.c.l.b16 %v358
    %v1066 = vunpack.c.h.b16 %v358
    %v1067 = vunpack.c.l.b16 %v359
    %v1068 = vunpack.c.h.b16 %v359
    %v1069 = vunpack.c.l.b16 %v360
    %v1070 = vunpack.c.h.b16 %v360
    %v1071 = vunpack.c.l.b16 %v361
    %v1072 = vunpack.c.h.b16 %v361
    %v1073 = vunpack.c.l.b16 %v362
    %v1074 = vunpack.c.h.b16 %v362
    %v1075 = vunpack.c.l.b16 %v363
    %v1076 = vunpack.c.h.b16 %v363
    %v1077 = vunpack.c.l.b16 %v364
    %v1078 = vunpack.c.h.b16 %v364
    %v1079 = vunpack.c.l.b16 %v365
    %v1080 = vunpack.c.h.b16 %v365
    %v1081 = vunpack.c.l.b16 %v366
    %v1082 = vunpack.c.h.b16 %v366
    %v1083 = vunpack.c.l.b16 %v367
    %v1084 = vunpack.c.h.b16 %v367
    %v1085 = vunpack.c.l.b16 %v368
    %v1086 = vunpack.c.h.b16 %v368
    %v1087 = vunpack.c.l.b16 %v369
    %v1088 = vunpack.c.h.b16 %v369
    %v1089 = vunpack.c.l.b16 %v370
    %v1090 = vunpack.c.h.b16 %v370
    %v1091 = vunpack.c.l.b16 %v371
    %v1092 = vunpack.c.h.b16 %v371
    %v1093 = vunpack.c.l.b16 %v372
    %v1094 = vunpack.c.h.b16 %v372
    %v1095 = vunpack.c.l.b16 %v373
    %v1096 = vunpack.c.h.b16 %v373
    %v1097 = vunpack.c.l.b16 %v374
    %v1098 = vunpack.c.h.b16 %v374
    %v1099 = vunpack.c.l.b16 %v375
    %v1100 = vunpack.c.h.b16 %v375
    %v1101 = vunpack.c.l.b16 %v376
    %v1102 = vunpack.c.h.b16 %v376
    %v1103 = vunpack.c.l.b16 %v377
    %v1104 = vunpack.c.h.b16 %v377
    %v1105 = vunpack.c.l.b16 %v378
    %v1106 = vunpack.c.h.b16 %v378
    %v1107 = vunpack.c.l.b16 %v379
    %v1108 = vunpack.c.h.b16 %v379
    %v1109 = vunpack.c.l.b16 %v380
    %v1110 = vunpack.c.h.b16 %v380
    %v1111 = vunpack.c.l.b16 %v381
    %v1112 = vunpack.c.h.b16 %v381
    %v1113 = vunpack.c.l.b16 %v382
    %v1114 = vunpack.c.h.b16 %v382
    %v1115 = vunpack.c.l.b16 %v383
    %v1116 = vunpack.c.h.b16 %v383
    %v1117 = vunpack.c.l.b16 %v384
    %v1118 = vunpack.c.h.b16 %v384
    %v1119 = vunpack.c.l.b16 %v385
    %v1120 = vunpack.c.h.b16 %v385
    %v1121 = vunpack.c.l.b16 %v386
    %v1122 = vunpack.c.h.b16 %v386
    %v1123 = vunpack.c.l.b16 %v387
    %v1124 = vunpack.c.h.b16 %v387
    %v1125 = vunpack.c.l.b16 %v388
    %v1126 = vunpack.c.h.b16 %v388
    %v1127 = vunpack.c.l.b16 %v389
    %v1128 = vunpack.c.h.b16 %v389
    %v1129 = vunpack.c.l.b16 %v390
    %v1130 = vunpack.c.h.b16 %v390
    %v1131 = vunpack.c.l.b16 %v391
    %v1132 = vunpack.c.h.b16 %v391
    %v1133 = vunpack.c.l.b16 %v392
    %v1134 = vunpack.c.h.b16 %v392
    %v1135 = vunpack.c.l.b16 %v393
    %v1136 = vunpack.c.h.b16 %v393
    %v1137 = vunpack.c.l.b16 %v394
    %v1138 = vunpack.c.h.b16 %v394
    %v1139 = vunpack.c.l.b16 %v395
    %v1140 = vunpack.c.h.b16 %v395
    %v1141 = vunpack.c.l.b16 %v396
    %v1142 = vunpack.c.h.b16 %v396
    %v1143 = vunpack.c.l.b16 %v397
    %v1144 = vunpack.c.h.b16 %v397
    %v1145 = vunpack.c.l.b16 %v398
    %v1146 = vunpack.c.h.b16 %v398
    %v1147 = vunpack.c.l.b16 %v399
    %v1148 = vunpack.c.h.b16 %v399
    %v1149 = vunpack.c.l.b16 %v400
    %v1150 = vunpack.c.h.b16 %v400
    %v1151 = vunpack.c.l.b16 %v401
    %v1152 = vunpack.c.h.b16 %v401
    %v1153 = vunpack.c.l.b16 %v402
    %v1154 = vunpack.c.h.b16 %v402
    %v1155 = vunpack.c.l.b16 %v403
    %v1156 = vunpack.c.h.b16 %v403
    %v1157 = vunpack.c.l.b16 %v404
    %v1158 = vunpack.c.h.b16 %v404
    %v1159 = vunpack.c.l.b16 %v405
    %v1160 = vunpack.c.h.b16 %v405
    %v1161 = vunpack.c.l.b16 %v406
    %v1162 = vunpack.c.h.b16 %v406
    %v1163 = vunpack.c.l.b16 %v407
    %v1164 = vunpack.c.h.b16 %v407
    %v1165 = vunpack.c.l.b16 %v408
    %v1166 = vunpack.c.h.b16 %v408
    %v1167 = vunpack.c.l.b16 %v409
    %v1168 = vunpack.c.h.b16 %v409
    %v1169 = vunpack.c.l.b16 %v410
    %v1170 = vunpack.c.h.b16 %v410
    %v1171 = vunpack.c.l.b16 %v411
    %v1172 = vunpack.c.h.b16 %v411
    %v1173 = vunpack.c.l.b16 %v412
    %v1174 = vunpack.c.h.b16 %v412
    %v1175 = vunpack.c.l.b16 %v413
    %v1176 = vunpack.c.h.b16 %v413
    %v1177 = vunpack.c.l.b16 %v414
    %v1178 = vunpack.c.h.b16 %v414
    %v1179 = vunpack.c.l.b16 %v415
    %v1180 = vunpack.c.h.b16 %v415
    %v1181 = vunpack.c.l.b16 %v416
    %v1182 = vunpack.c.h.b16 %v416
    %v1183 = vunpack.c.l.b16 %v417
    %v1184 = vunpack.c.h.b16 %v417
    %v1185 = vunpack.c.l.b16 %v418
    %v1186 = vunpack.c.h.b16 %v418
    %v1187 = vunpack.c.l.b16 %v419
    %v1188 = vunpack.c.h.b16 %v419
    %v1189 = vunpack.c.l.b16 %v420
    %v1190 = vunpack.c.h.b16 %v420
    %v1191 = vunpack.c.l.b16 %v421
    %v1192 = vunpack.c.h.b16 %v421
    %v1193 = vunpack.c.l.b16 %v422
    %v1194 = vunpack.c.h.b16 %v422
    %v1195 = vunpack.c.l.b16 %v423
    %v1196 = vunpack.c.h.b16 %v423
    %v1197 = vunpack.c.l.b16 %v424
    %v1198 = vunpack.c.h.b16 %v424
    %v1199 = vunpack.c.l.b16 %v425
    %v1200 = vunpack.c.h.b16 %v425
    %v1201 = vunpack.c.l.b16 %v426
    %v1202 = vunpack.c.h.b16 %v426
    %v1203 = vunpack.c.l.b16 %v427
    %v1204 = vunpack.c.h.b16 %v427
    %v1205 = vunpack.c.l.b16 %v428
    %v1206 = vunpack.c.h.b16 %v428
    %v1207 = vunpack.c.l.b16 %v429
    %v1208 = vunpack.c.h.b16 %v429
    %v1209 = vunpack.c.l.b16 %v430
    %v1210 = vunpack.c.h.b16 %v430
    %v1211 = vunpack.c.l.b16 %v431
    %v1212 = vunpack.c.h.b16 %v431
    %v1213 = vunpack.c.l.b16 %v432
    %v1214 = vunpack.c.h.b16 %v432
    %v1215 = vunpack.c.l.b16 %v433
    %v1216 = vunpack.c.h.b16 %v433
    %v1217 = vunpack.c.l.b16 %v434
    %v1218 = vunpack.c.h.b16 %v434
    %v1219 = vunpack.c.l.b16 %v435
    %v1220 = vunpack.c.h.b16 %v435
    %v1221 = vunpack.c.l.b16 %v436
    %v1222 = vunpack.c.h.b16 %v436
    %v1223 = vunpack.c.l.b16 %v437
    %v1224 = vunpack.c.h.b16 %v437
    %v1225 = vunpack.c.l.b16 %v438
    %v1226 = vunpack.c.h.b16 %v438
    %v1227 = vunpack.c.l.b16 %v439
    %v1228 = vunpack.c.h.b16 %v439
    %v1229 = vunpack.c.l.b16 %v440
    %v1230 = vunpack.c.h.b16 %v440
    %v1231 = vpack.c.b16 %v723, %v719
    %v1232 = vpack.c.b16 %v724, %v720
    %v1233 = vpack.c.b16 %v725, %v721
    %v1234 = vpack.c.b16 %v726, %v722
    %v1235 = vpack.c.b16 %v731, %v727
    %v1236 = vpack.c.b16 %v732, %v728
    %v1237 = vpack.c.b16 %v733, %v729
    %v1238 = vpack.c.b16 %v734, %v730
    %v1239 = vpack.c.b16 %v739, %v735
    %v1240 = vpack.c.b16 %v740, %v736
    %v1241 = vpack.c.b16 %v741, %v737
    %v1242 = vpack.c.b16 %v742, %v738
    %v1243 = vpack.c.b16 %v747, %v743
    %v1244 = vpack.c.b16 %v748, %v744
    %v1245 = vpack.c.b16 %v749, %v745
    %v1246 = vpack.c.b16 %v750, %v746
    %v1247 = vpack.c.b16 %v755, %v751
    %v1248 = vpack.c.b16 %v756, %v752
    %v1249 = vpack.c.b16 %v757, %v753
    %v1250 = vpack.c.b16 %v758, %v754
    %v1251 = vpack.c.b16 %v763, %v759
    %v1252 = vpack.c.b16 %v764, %v760
    %v1253 = vpack.c.b16 %v765, %v761
    %v1254 = vpack.c.b16 %v766, %v762
    %v1255 = vpack.c.b16 %v771, %v767
    %v1256 = vpack.c.b16 %v772, %v768
    %v1257 = vpack.c.b16 %v773, %v769
    %v1258 = vpack.c.b16 %v774, %v770
    %v1259 = vpack.c.b16 %v779, %v775
    %v1260 = vpack.c.b16 %v780, %v776
    %v1261 = vpack.c.b16 %v781, %v777
    %v1262 = vpack.c.b16 %v782, %v778
    %v1263 = vpack.c.b16 %v787, %v783
    %v1264 = vpack.c.b16 %v788, %v784
    %v1265 = vpack.c.b16 %v789, %v785
    %v1266 = vpack.c.b16 %v790, %v786
    %v1267 = vpack.c.b16 %v795, %v791
    %v1268 = vpack.c.b16 %v796, %v792
    %v1269 = vpack.c.b16 %v797, %v793
    %v1270 = vpack.c.b16 %v798, %v794
    %v1271 = vpack.c.b16 %v803, %v799
    %v1272 = vpack.c.b16 %v804, %v800
    %v1273 = vpack.c.b16 %v805, %v801
    %v1274 = vpack.c.b16 %v806, %v802
    %v1275 = vpack.c.b16 %v811, %v807
    %v1276 = vpack.c.b16 %v812, %v808
    %v1277 = vpack.c.b16 %v813, %v809
    %v1278 = vpack.c.b16 %v814, %v810
    %v1279 = vpack.c.b16 %v819, %v815
    %v1280 = vpack.c.b16 %v820, %v816
    %v1281 = vpack.c.b16 %v821, %v817
    %v1282 = vpack.c.b16 %v822, %v818
    %v1283 = vpack.c.b16 %v827, %v823
    %v1284 = vpack.c.b16 %v828, %v824
    %v1285 = vpack.c.b16 %v829, %v825
    %v1286 = vpack.c.b16 %v830, %v826
    %v1287 = vpack.c.b16 %v835, %v831
    %v1288 = vpack.c.b16 %v836, %v832
    %v1289 = vpack.c.b16 %v837, %v833
    %v1290 = vpack.c.b16 %v838, %v834
    %v1291 = vpack.c.b16 %v843, %v839
    %v1292 = vpack.c.b16 %v844, %v840
    %v1293 = vpack.c.b16 %v845, %v841
    %v1294 = vpack.c.b16 %v846, %v842
    %v1295 = vpack.c.b16 %v851, %v847
    %v1296 = vpack.c.b16 %v852, %v848
    %v1297 = vpack.c.b16 %v853, %v849
    %v1298 = vpack.c.b16 %v854, %v850
    %v1299 = vpack.c.b16 %v859, %v855
    %v1300 = vpack.c.b16 %v860, %v856
    %v1301 = vpack.c.b16 %v861, %v857
    %v1302 = vpack.c.b16 %v862, %v858
    %v1303 = vpack.c.b16 %v867, %v863
    %v1304 = vpack.c.b16 %v868, %v864
    %v1305 = vpack.c.b16 %v869, %v865
    %v1306 = vpack.c.b16 %v870, %v866
    %v1307 = vpack.c.b16 %v875, %v871
    %v1308 = vpack.c.b16 %v876, %v872
    %v1309 = vpack.c.b16 %v877, %v873
    %v1310 = vpack.c.b16 %v878, %v874
    %v1311 = vpack.c.b16 %v883, %v879
    %v1312 = vpack.c.b16 %v884, %v880
    %v1313 = vpack.c.b16 %v885, %v881
    %v1314 = vpack.c.b16 %v886, %v882
    %v1315 = vpack.c.b16 %v891, %v887
    %v1316 = vpack.c.b16 %v892, %v888
    %v1317 = vpack.c.b16 %v893, %v889
    %v1318 = vpack.c.b16 %v894, %v890
    %v1319 = vpack.c.b16 %v899, %v895
    %v1320 = vpack.c.b16 %v900, %v896
    %v1321 = vpack.c.b16 %v901, %v897
    %v1322 = vpack.c.b16 %v902, %v898
    %v1323 = vpack.c.b16 %v907, %v903
    %v1324 = vpack.c.b16 %v908, %v904
    %v1325 = vpack.c.b16 %v909, %v905
    %v1326 = vpack.c.b16 %v910, %v906
    %v1327 = vpack.c.b16 %v915, %v911
    %v1328 = vpack.c.b16 %v916, %v912
    %v1329 = vpack.c.b16 %v917, %v913
    %v1330 = vpack.c.b16 %v918, %v914
    %v1331 = vpack.c.b16 %v923, %v919
    %v1332 = vpack.c.b16 %v924, %v920
    %v1333 = vpack.c.b16 %v925, %v921
    %v1334 = vpack.c.b16 %v926, %v922
    %v1335 = vpack.c.b16 %v931, %v927
    %v1336 = vpack.c.b16 %v932, %v928
    %v1337 = vpack.c.b16 %v933, %v929
    %v1338 = vpack.c.b16 %v934, %v930
    %v1339 = vpack.c.b16 %v939, %v935
    %v1340 = vpack.c.b16 %v940, %v936
    %v1341 = vpack.c.b16 %v941, %v937
    %v1342 = vpack.c.b16 %v942, %v938
    %v1343 = vpack.c.b16 %v947, %v943
    %v1344 = vpack.c.b16 %v948, %v944
    %v1345 = vpack.c.b16 %v949, %v945
    %v1346 = vpack.c.b16 %v950, %v946
    %v1347 = vpack.c.b16 %v955, %v951
    %v1348 = vpack.c.b16 %v956, %v952
    %v1349 = vpack.c.b16 %v957, %v953
    %v1350 = vpack.c.b16 %v958, %v954
    %v1351 = vpack.c.b16 %v963, %v959
    %v1352 = vpack.c.b16 %v964, %v960
    %v1353 = vpack.c.b16 %v965, %v961
    %v1354 = vpack.c.b16 %v966, %v962
    %v1355 = vpack.c.b16 %v971, %v967
    %v1356 = vpack.c.b16 %v972, %v968
    %v1357 = vpack.c.b16 %v973, %v969
    %v1358 = vpack.c.b16 %v974, %v970
    %v1359 = vpack.c.b16 %v979, %v975
    %v1360 = vpack.c.b16 %v980, %v976
    %v1361 = vpack.c.b16 %v981, %v977
    %v1362 = vpack.c.b16 %v982, %v978
    %v1363 = vpack.c.b16 %v987, %v983
    %v1364 = vpack.c.b16 %v988, %v984
    %v1365 = vpack.c.b16 %v989, %v985
    %v1366 = vpack.c.b16 %v990, %v986
    %v1367 = vpack.c.b16 %v995, %v991
    %v1368 = vpack.c.b16 %v996, %v992
    %v1369 = vpack.c.b16 %v997, %v993
    %v1370 = vpack.c.b16 %v998, %v994
    %v1371 = vpack.c.b16 %v1003, %v999
    %v1372 = vpack.c.b16 %v1004, %v1000
    %v1373 = vpack.c.b16 %v1005, %v1001
    %v1374 = vpack.c.b16 %v1006, %v1002
    %v1375 = vpack.c.b16 %v1011, %v1007
    %v1376 = vpack.c.b16 %v1012, %v1008
    %v1377 = vpack.c.b16 %v1013, %v1009
    %v1378 = vpack.c.b16 %v1014, %v1010
    %v1379 = vpack.c.b16 %v1019, %v1015
    %v1380 = vpack.c.b16 %v1020, %v1016
    %v1381 = vpack.c.b16 %v1021, %v1017
    %v1382 = vpack.c.b16 %v1022, %v1018
    %v1383 = vpack.c.b16 %v1027, %v1023
    %v1384 = vpack.c.b16 %v1028, %v1024
    %v1385 = vpack.c.b16 %v1029, %v1025
    %v1386 = vpack.c.b16 %v1030, %v1026
    %v1387 = vpack.c.b16 %v1035, %v1031
    %v1388 = vpack.c.b16 %v1036, %v1032
    %v1389 = vpack.c.b16 %v1037, %v1033
    %v1390 = vpack.c.b16 %v1038, %v1034
    %v1391 = vpack.c.b16 %v1043, %v1039
    %v1392 = vpack.c.b16 %v1044, %v1040
    %v1393 = vpack.c.b16 %v1045, %v1041
    %v1394 = vpack.c.b16 %v1046, %v1042
    %v1395 = vpack.c.b16 %v1051, %v1047
    %v1396 = vpack.c.b16 %v1052, %v1048
    %v1397 = vpack.c.b16 %v1053, %v1049
    %v1398 = vpack.c.b16 %v1054, %v1050
    %v1399 = vpack.c.b16 %v1059, %v1055
    %v1400 = vpack.c.b16 %v1060, %v1056
    %v1401 = vpack.c.b16 %v1061, %v1057
    %v1402 = vpack.c.b16 %v1062, %v1058
    %v1403 = vpack.c.b16 %v1067, %v1063
    %v1404 = vpack.c.b16 %v1068, %v1064
    %v1405 = vpack.c.b16 %v1069, %v1065
    %v1406 = vpack.c.b16 %v1070, %v1066
    %v1407 = vpack.c.b16 %v1075, %v1071
    %v1408 = vpack.c.b16 %v1076, %v1072
    %v1409 = vpack.c.b16 %v1077, %v1073
    %v1410 = vpack.c.b16 %v1078, %v1074
    %v1411 = vpack.c.b16 %v1083, %v1079
    %v1412 = vpack.c.b16 %v1084, %v1080
    %v1413 = vpack.c.b16 %v1085, %v1081
    %v1414 = vpack.c.b16 %v1086, %v1082
    %v1415 = vpack.c.b16 %v1091, %v1087
    %v1416 = vpack.c.b16 %v1092, %v1088
    %v1417 = vpack.c.b16 %v1093, %v1089
    %v1418 = vpack.c.b16 %v1094, %v1090
    %v1419 = vpack.c.b16 %v1099, %v1095
    %v1420 = vpack.c.b16 %v1100, %v1096
    %v1421 = vpack.c.b16 %v1101, %v1097
    %v1422 = vpack.c.b16 %v1102, %v1098
    %v1423 = vpack.c.b16 %v1107, %v1103
    %v1424 = vpack.c.b16 %v1108, %v1104
    %v1425 = vpack.c.b16 %v1109, %v1105
    %v1426 = vpack.c.b16 %v1110, %v1106
    %v1427 = vpack.c.b16 %v1115, %v1111
    %v1428 = vpack.c.b16 %v1116, %v1112
    %v1429 = vpack.c.b16 %v1117, %v1113
    %v1430 = vpack.c.b16 %v1118, %v1114
    %v1431 = vpack.c.b16 %v1123, %v1119
    %v1432 = vpack.c.b16 %v1124, %v1120
    %v1433 = vpack.c.b16 %v1125, %v1121
    %v1434 = vpack.c.b16 %v1126, %v1122
    %v1435 = vpack.c.b16 %v1131, %v1127
    %v1436 = vpack.c.b16 %v1132, %v1128
    %v1437 = vpack.c.b16 %v1133, %v1129
    %v1438 = vpack.c.b16 %v1134, %v1130
    %v1439 = vpack.c.b16 %v1139, %v1135
    %v1440 = vpack.c.b16 %v1140, %v1136
    %v1441 = vpack.c.b16 %v1141, %v1137
    %v1442 = vpack.c.b16 %v1142, %v1138
    %v1443 = vpack.c.b16 %v1147, %v1143
    %v1444 = vpack.c.b16 %v1148, %v1144
    %v1445 = vpack.c.b16 %v1149, %v1145
    %v1446 = vpack.c.b16 %v1150, %v1146
    %v1447 = vpack.c.b16 %v1155, %v1151
    %v1448 = vpack.c.b16 %v1156, %v1152
    %v1449 = vpack.c.b16 %v1157, %v1153
    %v1450 = vpack.c.b16 %v1158, %v1154
    %v1451 = vpack.c.b16 %v1163, %v1159
    %v1452 = vpack.c.b16 %v1164, %v1160
    %v1453 = vpack.c.b16 %v1165, %v1161
    %v1454 = vpack.c.b16 %v1166, %v1162
    %v1455 = vpack.c.b16 %v1171, %v1167
    %v1456 = vpack.c.b16 %v1172, %v1168
    %v1457 = vpack.c.b16 %v1173, %v1169
    %v1458 = vpack.c.b16 %v1174, %v1170
    %v1459 = vpack.c.b16 %v1179, %v1175
    %v1460 = vpack.c.b16 %v1180, %v1176
    %v1461 = vpack.c.b16 %v1181, %v1177
    %v1462 = vpack.c.b16 %v1182, %v1178
    %v1463 = vpack.c.b16 %v1187, %v1183
    %v1464 = vpack.c.b16 %v1188, %v1184
    %v1465 = vpack.c.b16 %v1189, %v1185
    %v1466 = vpack.c.b16 %v1190, %v1186
    %v1467 = vpack.c.b16 %v1195, %v1191
    %v1468 = vpack.c.b16 %v1196, %v1192
    %v1469 = vpack.c.b16 %v1197, %v1193
    %v1470 = vpack.c.b16 %v1198, %v1194
    %v1471 = vpack.c.b16 %v1203, %v1199
    %v1472 = vpack.c.b16 %v1204, %v1200
    %v1473 = vpack.c.b16 %v1205, %v1201
    %v1474 = vpack.c.b16 %v1206, %v1202
    %v1475 = vpack.c.b16 %v1211, %v1207
    %v1476 = vpack.c.b16 %v1212, %v1208
    %v1477 = vpack.c.b16 %v1213, %v1209
    %v1478 = vpack.c.b16 %v1214, %v1210
    %v1479 = vpack.c.b16 %v1219, %v1215
    %v1480 = vpack.c.b16 %v1220, %v1216
    %v1481 = vpack.c.b16 %v1221, %v1217
    %v1482 = vpack.c.b16 %v1222, %v1218
    %v1483 = vpack.c.b16 %v1227, %v1223
    %v1484 = vpack.c.b16 %v1228, %v1224
    %v1485 = vpack.c.b16 %v1229, %v1225
    %v1486 = vpack.c.b16 %v1230, %v1226
    %1743 = vmatprep.subr.bf16.mxu0 %v1260
    %1744 = vmatpush1.bf16.msra.mxu0 %v1259
    %1745 = vmatprep.subr.bf16.mxu0 %v1256
    %1746 = vmatpush1.bf16.msra.mxu0 %v1255
    %1747 = vmatprep.subr.bf16.mxu0 %v1252
    %1748 = vmatpush1.bf16.msra.mxu0 %v1251
    %1749 = vmatprep.subr.bf16.mxu0 %v1248
    %1750 = vmatpush1.bf16.msra.mxu0 %v1247
    %1751 = vmatprep.subr.bf16.mxu0 %v1244
    %1752 = vmatpush1.bf16.msra.mxu0 %v1243
    %1753 = vmatprep.subr.bf16.mxu0 %v1240
    %1754 = vmatpush1.bf16.msra.mxu0 %v1239
    %1755 = vmatprep.subr.bf16.mxu0 %v1236
    %1756 = vmatpush1.bf16.msra.mxu0 %v1235
    %1757 = vmatprep.subr.bf16.mxu0 %v1232
    %1758 = vmatpush1.bf16.msra.mxu0 %v1231
    %1759 = vmatprep.subr.bf16.mxu0 %v1292
    %1760 = vmatpush2.bf16.msra.mxu0 %v1291
    %1761 = vmatprep.subr.bf16.mxu0 %v1288
    %1762 = vmatpush2.bf16.msra.mxu0 %v1287
    %1763 = vmatprep.subr.bf16.mxu0 %v1284
    %1764 = vmatpush2.bf16.msra.mxu0 %v1283
    %1765 = vmatprep.subr.bf16.mxu0 %v1280
    %1766 = vmatpush2.bf16.msra.mxu0 %v1279
    %1767 = vmatprep.subr.bf16.mxu0 %v1276
    %1768 = vmatpush2.bf16.msra.mxu0 %v1275
    %1769 = vmatprep.subr.bf16.mxu0 %v1272
    %1770 = vmatpush2.bf16.msra.mxu0 %v1271
    %1771 = vmatprep.subr.bf16.mxu0 %v1268
    %1772 = vmatpush2.bf16.msra.mxu0 %v1267
    %1773 = vmatprep.subr.bf16.mxu0 %v1264
    %1774 = vmatpush2.bf16.msra.mxu0 %v1263
    %1775 = vmatprep.mubr.bf16.mxu0 %v178
    %1776 = vmatmul.mubr.bf16.gmra.mxu0 %v177
    %v1777 = vpop.f32.mrf.mxu0
    %v1778 = vadd.f32 %v446, %v1777
    %v1779 = vpop.f32.mrf.mxu0
    %v1780 = vadd.f32 %v450, %v1779
    %v1781 = vpop.f32.mrf.mxu0
    %v1782 = vpop.f32.mrf.mxu0
    %1783 = vdwg.mxu0
    %1784 = vmatprep.subr.bf16.mxu0 %v1324
    %1785 = vmatpush1.bf16.msra.mxu0 %v1323
    %1786 = vmatprep.subr.bf16.mxu0 %v1320
    %1787 = vmatpush1.bf16.msra.mxu0 %v1319
    %1788 = vmatprep.subr.bf16.mxu0 %v1316
    %1789 = vmatpush1.bf16.msra.mxu0 %v1315
    %1790 = vmatprep.subr.bf16.mxu0 %v1312
    %1791 = vmatpush1.bf16.msra.mxu0 %v1311
    %1792 = vmatprep.subr.bf16.mxu0 %v1308
    %1793 = vmatpush1.bf16.msra.mxu0 %v1307
    %1794 = vmatprep.subr.bf16.mxu0 %v1304
    %1795 = vmatpush1.bf16.msra.mxu0 %v1303
    %1796 = vmatprep.subr.bf16.mxu0 %v1300
    %1797 = vmatpush1.bf16.msra.mxu0 %v1299
    %1798 = vmatprep.subr.bf16.mxu0 %v1296
    %1799 = vmatpush1.bf16.msra.mxu0 %v1295
    %1800 = vmatprep.subr.bf16.mxu0 %v1356
    %1801 = vmatpush2.bf16.msra.mxu0 %v1355
    %1802 = vmatprep.subr.bf16.mxu0 %v1352
    %1803 = vmatpush2.bf16.msra.mxu0 %v1351
    %1804 = vmatprep.subr.bf16.mxu0 %v1348
    %1805 = vmatpush2.bf16.msra.mxu0 %v1347
    %1806 = vmatprep.subr.bf16.mxu0 %v1344
    %1807 = vmatpush2.bf16.msra.mxu0 %v1343
    %1808 = vmatprep.subr.bf16.mxu0 %v1340
    %1809 = vmatpush2.bf16.msra.mxu0 %v1339
    %1810 = vmatprep.subr.bf16.mxu0 %v1336
    %1811 = vmatpush2.bf16.msra.mxu0 %v1335
    %1812 = vmatprep.subr.bf16.mxu0 %v1332
    %1813 = vmatpush2.bf16.msra.mxu0 %v1331
    %1814 = vmatprep.subr.bf16.mxu0 %v1328
    %1815 = vmatpush2.bf16.msra.mxu0 %v1327
    %1816 = vmatprep.mubr.bf16.mxu0 %v180
    %1817 = vmatmul.mubr.bf16.gmra.mxu0 %v179
    %v1818 = vpop.f32.mrf.mxu0
    %v1819 = vadd.f32 %v1778, %v1818
    %v1820 = vpop.f32.mrf.mxu0
    %v1821 = vadd.f32 %v1780, %v1820
    %v1822 = vpop.f32.mrf.mxu0
    %v1823 = vpop.f32.mrf.mxu0
    %1824 = vdwg.mxu0
    %1825 = vmatprep.subr.bf16.mxu0 %v1388
    %1826 = vmatpush1.bf16.msra.mxu0 %v1387
    %1827 = vmatprep.subr.bf16.mxu0 %v1384
    %1828 = vmatpush1.bf16.msra.mxu0 %v1383
    %1829 = vmatprep.subr.bf16.mxu0 %v1380
    %1830 = vmatpush1.bf16.msra.mxu0 %v1379
    %1831 = vmatprep.subr.bf16.mxu0 %v1376
    %1832 = vmatpush1.bf16.msra.mxu0 %v1375
    %1833 = vmatprep.subr.bf16.mxu0 %v1372
    %1834 = vmatpush1.bf16.msra.mxu0 %v1371
    %1835 = vmatprep.subr.bf16.mxu0 %v1368
    %1836 = vmatpush1.bf16.msra.mxu0 %v1367
    %1837 = vmatprep.subr.bf16.mxu0 %v1364
    %1838 = vmatpush1.bf16.msra.mxu0 %v1363
    %1839 = vmatprep.subr.bf16.mxu0 %v1360
    %1840 = vmatpush1.bf16.msra.mxu0 %v1359
    %1841 = vmatprep.subr.bf16.mxu0 %v1420
    %1842 = vmatpush2.bf16.msra.mxu0 %v1419
    %1843 = vmatprep.subr.bf16.mxu0 %v1416
    %1844 = vmatpush2.bf16.msra.mxu0 %v1415
    %1845 = vmatprep.subr.bf16.mxu0 %v1412
    %1846 = vmatpush2.bf16.msra.mxu0 %v1411
    %1847 = vmatprep.subr.bf16.mxu0 %v1408
    %1848 = vmatpush2.bf16.msra.mxu0 %v1407
    %1849 = vmatprep.subr.bf16.mxu0 %v1404
    %1850 = vmatpush2.bf16.msra.mxu0 %v1403
    %1851 = vmatprep.subr.bf16.mxu0 %v1400
    %1852 = vmatpush2.bf16.msra.mxu0 %v1399
    %1853 = vmatprep.subr.bf16.mxu0 %v1396
    %1854 = vmatpush2.bf16.msra.mxu0 %v1395
    %1855 = vmatprep.subr.bf16.mxu0 %v1392
    %1856 = vmatpush2.bf16.msra.mxu0 %v1391
    %1857 = vmatprep.mubr.bf16.mxu0 %v182
    %1858 = vmatmul.mubr.bf16.gmra.mxu0 %v181
    %v1859 = vpop.f32.mrf.mxu0
    %v1860 = vadd.f32 %v1819, %v1859
    %v1861 = vpop.f32.mrf.mxu0
    %v1862 = vadd.f32 %v1821, %v1861
    %v1863 = vpop.f32.mrf.mxu0
    %v1864 = vpop.f32.mrf.mxu0
    %1865 = vdwg.mxu0
    %1866 = vmatprep.subr.bf16.mxu0 %v1452
    %1867 = vmatpush1.bf16.msra.mxu0 %v1451
    %1868 = vmatprep.subr.bf16.mxu0 %v1448
    %1869 = vmatpush1.bf16.msra.mxu0 %v1447
    %1870 = vmatprep.subr.bf16.mxu0 %v1444
    %1871 = vmatpush1.bf16.msra.mxu0 %v1443
    %1872 = vmatprep.subr.bf16.mxu0 %v1440
    %1873 = vmatpush1.bf16.msra.mxu0 %v1439
    %1874 = vmatprep.subr.bf16.mxu0 %v1436
    %1875 = vmatpush1.bf16.msra.mxu0 %v1435
    %1876 = vmatprep.subr.bf16.mxu0 %v1432
    %1877 = vmatpush1.bf16.msra.mxu0 %v1431
    %1878 = vmatprep.subr.bf16.mxu0 %v1428
    %1879 = vmatpush1.bf16.msra.mxu0 %v1427
    %1880 = vmatprep.subr.bf16.mxu0 %v1424
    %1881 = vmatpush1.bf16.msra.mxu0 %v1423
    %1882 = vmatprep.subr.bf16.mxu0 %v1484
    %1883 = vmatpush2.bf16.msra.mxu0 %v1483
    %1884 = vmatprep.subr.bf16.mxu0 %v1480
    %1885 = vmatpush2.bf16.msra.mxu0 %v1479
    %1886 = vmatprep.subr.bf16.mxu0 %v1476
    %1887 = vmatpush2.bf16.msra.mxu0 %v1475
    %1888 = vmatprep.subr.bf16.mxu0 %v1472
    %1889 = vmatpush2.bf16.msra.mxu0 %v1471
    %1890 = vmatprep.subr.bf16.mxu0 %v1468
    %1891 = vmatpush2.bf16.msra.mxu0 %v1467
    %1892 = vmatprep.subr.bf16.mxu0 %v1464
    %1893 = vmatpush2.bf16.msra.mxu0 %v1463
    %1894 = vmatprep.subr.bf16.mxu0 %v1460
    %1895 = vmatpush2.bf16.msra.mxu0 %v1459
    %1896 = vmatprep.subr.bf16.mxu0 %v1456
    %1897 = vmatpush2.bf16.msra.mxu0 %v1455
    %1898 = vmatprep.mubr.bf16.mxu0 %v184
    %1899 = vmatmul.mubr.bf16.gmra.mxu0 %v183
    %v1900 = vpop.f32.mrf.mxu0
    %v1901 = vadd.f32 %v1860, %v1900
    %v1902 = vpop.f32.mrf.mxu0
    %v1903 = vadd.f32 %v1862, %v1902
    %v1904 = vpop.f32.mrf.mxu0
    %v1905 = vpop.f32.mrf.mxu0
    %1906 = vdwg.mxu0
    %1907 = vmatprep.subr.bf16.mxu0 %v1262
    %1908 = vmatpush1.bf16.msra.mxu0 %v1261
    %1909 = vmatprep.subr.bf16.mxu0 %v1258
    %1910 = vmatpush1.bf16.msra.mxu0 %v1257
    %1911 = vmatprep.subr.bf16.mxu0 %v1254
    %1912 = vmatpush1.bf16.msra.mxu0 %v1253
    %1913 = vmatprep.subr.bf16.mxu0 %v1250
    %1914 = vmatpush1.bf16.msra.mxu0 %v1249
    %1915 = vmatprep.subr.bf16.mxu0 %v1246
    %1916 = vmatpush1.bf16.msra.mxu0 %v1245
    %1917 = vmatprep.subr.bf16.mxu0 %v1242
    %1918 = vmatpush1.bf16.msra.mxu0 %v1241
    %1919 = vmatprep.subr.bf16.mxu0 %v1238
    %1920 = vmatpush1.bf16.msra.mxu0 %v1237
    %1921 = vmatprep.subr.bf16.mxu0 %v1234
    %1922 = vmatpush1.bf16.msra.mxu0 %v1233
    %1923 = vmatprep.subr.bf16.mxu0 %v1294
    %1924 = vmatpush2.bf16.msra.mxu0 %v1293
    %1925 = vmatprep.subr.bf16.mxu0 %v1290
    %1926 = vmatpush2.bf16.msra.mxu0 %v1289
    %1927 = vmatprep.subr.bf16.mxu0 %v1286
    %1928 = vmatpush2.bf16.msra.mxu0 %v1285
    %1929 = vmatprep.subr.bf16.mxu0 %v1282
    %1930 = vmatpush2.bf16.msra.mxu0 %v1281
    %1931 = vmatprep.subr.bf16.mxu0 %v1278
    %1932 = vmatpush2.bf16.msra.mxu0 %v1277
    %1933 = vmatprep.subr.bf16.mxu0 %v1274
    %1934 = vmatpush2.bf16.msra.mxu0 %v1273
    %1935 = vmatprep.subr.bf16.mxu0 %v1270
    %1936 = vmatpush2.bf16.msra.mxu0 %v1269
    %1937 = vmatprep.subr.bf16.mxu0 %v1266
    %1938 = vmatpush2.bf16.msra.mxu0 %v1265
    %1939 = vmatprep.mubr.bf16.mxu0 %v178
    %1940 = vmatmul.mubr.bf16.gmra.mxu0 %v177
    %v1941 = vpop.f32.mrf.mxu0
    %v1942 = vadd.f32 %v454, %v1941
    %v1943 = vpop.f32.mrf.mxu0
    %v1944 = vadd.f32 %v458, %v1943
    %v1945 = vpop.f32.mrf.mxu0
    %v1946 = vpop.f32.mrf.mxu0
    %1947 = vdwg.mxu0
    %1948 = vmatprep.subr.bf16.mxu0 %v1326
    %1949 = vmatpush1.bf16.msra.mxu0 %v1325
    %1950 = vmatprep.subr.bf16.mxu0 %v1322
    %1951 = vmatpush1.bf16.msra.mxu0 %v1321
    %1952 = vmatprep.subr.bf16.mxu0 %v1318
    %1953 = vmatpush1.bf16.msra.mxu0 %v1317
    %1954 = vmatprep.subr.bf16.mxu0 %v1314
    %1955 = vmatpush1.bf16.msra.mxu0 %v1313
    %1956 = vmatprep.subr.bf16.mxu0 %v1310
    %1957 = vmatpush1.bf16.msra.mxu0 %v1309
    %1958 = vmatprep.subr.bf16.mxu0 %v1306
    %1959 = vmatpush1.bf16.msra.mxu0 %v1305
    %1960 = vmatprep.subr.bf16.mxu0 %v1302
    %1961 = vmatpush1.bf16.msra.mxu0 %v1301
    %1962 = vmatprep.subr.bf16.mxu0 %v1298
    %1963 = vmatpush1.bf16.msra.mxu0 %v1297
    %1964 = vmatprep.subr.bf16.mxu0 %v1358
    %1965 = vmatpush2.bf16.msra.mxu0 %v1357
    %1966 = vmatprep.subr.bf16.mxu0 %v1354
    %1967 = vmatpush2.bf16.msra.mxu0 %v1353
    %1968 = vmatprep.subr.bf16.mxu0 %v1350
    %1969 = vmatpush2.bf16.msra.mxu0 %v1349
    %1970 = vmatprep.subr.bf16.mxu0 %v1346
    %1971 = vmatpush2.bf16.msra.mxu0 %v1345
    %1972 = vmatprep.subr.bf16.mxu0 %v1342
    %1973 = vmatpush2.bf16.msra.mxu0 %v1341
    %1974 = vmatprep.subr.bf16.mxu0 %v1338
    %1975 = vmatpush2.bf16.msra.mxu0 %v1337
    %1976 = vmatprep.subr.bf16.mxu0 %v1334
    %1977 = vmatpush2.bf16.msra.mxu0 %v1333
    %1978 = vmatprep.subr.bf16.mxu0 %v1330
    %1979 = vmatpush2.bf16.msra.mxu0 %v1329
    %1980 = vmatprep.mubr.bf16.mxu0 %v180
    %1981 = vmatmul.mubr.bf16.gmra.mxu0 %v179
    %v1982 = vpop.f32.mrf.mxu0
    %v1983 = vadd.f32 %v1942, %v1982
    %v1984 = vpop.f32.mrf.mxu0
    %v1985 = vadd.f32 %v1944, %v1984
    %v1986 = vpop.f32.mrf.mxu0
    %v1987 = vpop.f32.mrf.mxu0
    %1988 = vdwg.mxu0
    %1989 = vmatprep.subr.bf16.mxu0 %v1390
    %1990 = vmatpush1.bf16.msra.mxu0 %v1389
    %1991 = vmatprep.subr.bf16.mxu0 %v1386
    %1992 = vmatpush1.bf16.msra.mxu0 %v1385
    %1993 = vmatprep.subr.bf16.mxu0 %v1382
    %1994 = vmatpush1.bf16.msra.mxu0 %v1381
    %1995 = vmatprep.subr.bf16.mxu0 %v1378
    %1996 = vmatpush1.bf16.msra.mxu0 %v1377
    %1997 = vmatprep.subr.bf16.mxu0 %v1374
    %1998 = vmatpush1.bf16.msra.mxu0 %v1373
    %1999 = vmatprep.subr.bf16.mxu0 %v1370
    %2000 = vmatpush1.bf16.msra.mxu0 %v1369
    %2001 = vmatprep.subr.bf16.mxu0 %v1366
    %2002 = vmatpush1.bf16.msra.mxu0 %v1365
    %2003 = vmatprep.subr.bf16.mxu0 %v1362
    %2004 = vmatpush1.bf16.msra.mxu0 %v1361
    %2005 = vmatprep.subr.bf16.mxu0 %v1422
    %2006 = vmatpush2.bf16.msra.mxu0 %v1421
    %2007 = vmatprep.subr.bf16.mxu0 %v1418
    %2008 = vmatpush2.bf16.msra.mxu0 %v1417
    %2009 = vmatprep.subr.bf16.mxu0 %v1414
    %2010 = vmatpush2.bf16.msra.mxu0 %v1413
    %2011 = vmatprep.subr.bf16.mxu0 %v1410
    %2012 = vmatpush2.bf16.msra.mxu0 %v1409
    %2013 = vmatprep.subr.bf16.mxu0 %v1406
    %2014 = vmatpush2.bf16.msra.mxu0 %v1405
    %2015 = vmatprep.subr.bf16.mxu0 %v1402
    %2016 = vmatpush2.bf16.msra.mxu0 %v1401
    %2017 = vmatprep.subr.bf16.mxu0 %v1398
    %2018 = vmatpush2.bf16.msra.mxu0 %v1397
    %2019 = vmatprep.subr.bf16.mxu0 %v1394
    %2020 = vmatpush2.bf16.msra.mxu0 %v1393
    %2021 = vmatprep.mubr.bf16.mxu0 %v182
    %2022 = vmatmul.mubr.bf16.gmra.mxu0 %v181
    %v2023 = vpop.f32.mrf.mxu0
    %v2024 = vadd.f32 %v1983, %v2023
    %v2025 = vpop.f32.mrf.mxu0
    %v2026 = vadd.f32 %v1985, %v2025
    %v2027 = vpop.f32.mrf.mxu0
    %v2028 = vpop.f32.mrf.mxu0
    %2029 = vdwg.mxu0
    %2030 = vmatprep.subr.bf16.mxu0 %v1454
    %2031 = vmatpush1.bf16.msra.mxu0 %v1453
    %2032 = vmatprep.subr.bf16.mxu0 %v1450
    %2033 = vmatpush1.bf16.msra.mxu0 %v1449
    %2034 = vmatprep.subr.bf16.mxu0 %v1446
    %2035 = vmatpush1.bf16.msra.mxu0 %v1445
    %2036 = vmatprep.subr.bf16.mxu0 %v1442
    %2037 = vmatpush1.bf16.msra.mxu0 %v1441
    %2038 = vmatprep.subr.bf16.mxu0 %v1438
    %2039 = vmatpush1.bf16.msra.mxu0 %v1437
    %2040 = vmatprep.subr.bf16.mxu0 %v1434
    %2041 = vmatpush1.bf16.msra.mxu0 %v1433
    %2042 = vmatprep.subr.bf16.mxu0 %v1430
    %2043 = vmatpush1.bf16.msra.mxu0 %v1429
    %2044 = vmatprep.subr.bf16.mxu0 %v1426
    %2045 = vmatpush1.bf16.msra.mxu0 %v1425
    %2046 = vmatprep.subr.bf16.mxu0 %v1486
    %2047 = vmatpush2.bf16.msra.mxu0 %v1485
    %2048 = vmatprep.subr.bf16.mxu0 %v1482
    %2049 = vmatpush2.bf16.msra.mxu0 %v1481
    %2050 = vmatprep.subr.bf16.mxu0 %v1478
    %2051 = vmatpush2.bf16.msra.mxu0 %v1477
    %2052 = vmatprep.subr.bf16.mxu0 %v1474
    %2053 = vmatpush2.bf16.msra.mxu0 %v1473
    %2054 = vmatprep.subr.bf16.mxu0 %v1470
    %2055 = vmatpush2.bf16.msra.mxu0 %v1469
    %2056 = vmatprep.subr.bf16.mxu0 %v1466
    %2057 = vmatpush2.bf16.msra.mxu0 %v1465
    %2058 = vmatprep.subr.bf16.mxu0 %v1462
    %2059 = vmatpush2.bf16.msra.mxu0 %v1461
    %2060 = vmatprep.subr.bf16.mxu0 %v1458
    %2061 = vmatpush2.bf16.msra.mxu0 %v1457
    %2062 = vmatprep.mubr.bf16.mxu0 %v184
    %2063 = vmatmul.mubr.bf16.gmra.mxu0 %v183
    %v2064 = vpop.f32.mrf.mxu0
    %v2065 = vadd.f32 %v2024, %v2064
    %v2066 = vpop.f32.mrf.mxu0
    %v2067 = vadd.f32 %v2026, %v2066
    %v2068 = vpop.f32.mrf.mxu0
    %v2069 = vpop.f32.mrf.mxu0
    %2070 = vdwg.mxu0
    %v2071 = vmax.f32 %v1901, 0.0
    %v2072 = vmax.f32 %v1903, 0.0
    %v2073 = vmax.f32 %v2065, 0.0
    %v2074 = vmax.f32 %v2067, 0.0
    %v2075 = vld [vmem:[%s3] sm:$0xf]
    %v2076 = vld [vmem:[%s4] sm:$0xf]
    %v2077 = vadd.f32 %v2071, %v2072
    %v2078 = vadd.f32 %v2077, %v2073
    %v2079 = vadd.f32 %v2078, %v2074
    %2080 = vadd.xlane.f32.xlu0 %v2079
    %v2081 = vpop.xlane.xlu0 %2080
    %v2082 = vrcp.pop 512.0
    %v2083 = vmul.f32 %v2081, %v2082
    %v2084 = vsub.f32 %v2071, %v2083
    %v2085 = vsub.f32 %v2072, %v2083
    %v2086 = vsub.f32 %v2073, %v2083
    %v2087 = vsub.f32 %v2074, %v2083
    %v2088 = vmul.f32 %v2084, %v2084
    %v2089 = vmul.f32 %v2085, %v2085
    %v2090 = vmul.f32 %v2086, %v2086
    %v2091 = vmul.f32 %v2087, %v2087
    %v2092 = vadd.f32 %v2088, %v2089
    %v2093 = vadd.f32 %v2092, %v2090
    %v2094 = vadd.f32 %v2093, %v2091
    %2095 = vadd.xlane.f32.xlu0 %v2094
    %v2096 = vpop.xlane.xlu0 %2095
    %v2097 = vmul.f32 %v2096, %v2082
    %v2098 = vadd.f32 %v2097, 1e-05
    %v2099 = vrsqrt.pop %v2098
    %v2100 = vmul.f32 %v2084, %v2099
    %v2101 = vmul.f32 %v2085, %v2099
    %v2102 = vmul.f32 %v2086, %v2099
    %v2103 = vmul.f32 %v2087, %v2099
    %v2105 = vlaneseq
    %v2106 = vshrl.u32 %v2105, 7
    %v2107 = vsub.s32 0, %v2106
    %v2108 = vrot.slane %v2075, %v2107
    %v2109 = vlaneseq
    %v2110 = vshrl.u32 %v2109, 7
    %v2111 = vsub.s32 1, %v2110
    %v2112 = vrot.slane %v2075, %v2111
    %v2113 = vlaneseq
    %v2114 = vshrl.u32 %v2113, 7
    %v2115 = vsub.s32 2, %v2114
    %v2116 = vrot.slane %v2075, %v2115
    %v2117 = vlaneseq
    %v2118 = vshrl.u32 %v2117, 7
    %v2119 = vsub.s32 3, %v2118
    %v2120 = vrot.slane %v2075, %v2119
    %v2125 = vmul.f32 %v2100, %v2108
    %v2126 = vmul.f32 %v2101, %v2112
    %v2127 = vmul.f32 %v2102, %v2116
    %v2128 = vmul.f32 %v2103, %v2120
    %v2130 = vlaneseq
    %v2131 = vshrl.u32 %v2130, 7
    %v2132 = vsub.s32 0, %v2131
    %v2133 = vrot.slane %v2076, %v2132
    %v2134 = vlaneseq
    %v2135 = vshrl.u32 %v2134, 7
    %v2136 = vsub.s32 1, %v2135
    %v2137 = vrot.slane %v2076, %v2136
    %v2138 = vlaneseq
    %v2139 = vshrl.u32 %v2138, 7
    %v2140 = vsub.s32 2, %v2139
    %v2141 = vrot.slane %v2076, %v2140
    %v2142 = vlaneseq
    %v2143 = vshrl.u32 %v2142, 7
    %v2144 = vsub.s32 3, %v2143
    %v2145 = vrot.slane %v2076, %v2144
    %v2150 = vadd.f32 %v2125, %v2133
    %v2151 = vadd.f32 %v2126, %v2137
    %v2152 = vadd.f32 %v2127, %v2141
    %v2153 = vadd.f32 %v2128, %v2145
    %v2154 = vpack.c.bf16 %v2150, %v2150
    %v2155 = vpack.c.bf16 %v2151, %v2151
    %v2156 = vpack.c.bf16 %v2152, %v2152
    %v2157 = vpack.c.bf16 %v2153, %v2153
    %v2158 = vld [vmem:[#allocation7] sm:$0xff]
    %v2159 = vld [vmem:[#allocation7 + $0x8] sm:$0xff]
    %v2160 = vld [vmem:[#allocation7 + $0x10] sm:$0xff]
    %v2161 = vld [vmem:[#allocation7 + $0x18] sm:$0xff]
    %v2162 = vld [vmem:[#allocation7 + $0x20] sm:$0xff]
    %v2163 = vld [vmem:[#allocation7 + $0x28] sm:$0xff]
    %v2164 = vld [vmem:[#allocation7 + $0x30] sm:$0xff]
    %v2165 = vld [vmem:[#allocation7 + $0x38] sm:$0xff]
    %v2166 = vld [vmem:[#allocation7 + $0x40] sm:$0xff]
    %v2167 = vld [vmem:[#allocation7 + $0x48] sm:$0xff]
    %v2168 = vld [vmem:[#allocation7 + $0x50] sm:$0xff]
    %v2169 = vld [vmem:[#allocation7 + $0x58] sm:$0xff]
    %v2170 = vld [vmem:[#allocation7 + $0x60] sm:$0xff]
    %v2171 = vld [vmem:[#allocation7 + $0x68] sm:$0xff]
    %v2172 = vld [vmem:[#allocation7 + $0x70] sm:$0xff]
    %v2173 = vld [vmem:[#allocation7 + $0x78] sm:$0xff]
    %v2174 = vld [vmem:[#allocation7 + $0x80] sm:$0xff]
    %v2175 = vld [vmem:[#allocation7 + $0x88] sm:$0xff]
    %v2176 = vld [vmem:[#allocation7 + $0x90] sm:$0xff]
    %v2177 = vld [vmem:[#allocation7 + $0x98] sm:$0xff]
    %v2178 = vld [vmem:[#allocation7 + $0xa0] sm:$0xff]
    %v2179 = vld [vmem:[#allocation7 + $0xa8] sm:$0xff]
    %v2180 = vld [vmem:[#allocation7 + $0xb0] sm:$0xff]
    %v2181 = vld [vmem:[#allocation7 + $0xb8] sm:$0xff]
    %v2182 = vld [vmem:[#allocation7 + $0xc0] sm:$0xff]
    %v2183 = vld [vmem:[#allocation7 + $0xc8] sm:$0xff]
    %v2184 = vld [vmem:[#allocation7 + $0xd0] sm:$0xff]
    %v2185 = vld [vmem:[#allocation7 + $0xd8] sm:$0xff]
    %v2186 = vld [vmem:[#allocation7 + $0xe0] sm:$0xff]
    %v2187 = vld [vmem:[#allocation7 + $0xe8] sm:$0xff]
    %v2188 = vld [vmem:[#allocation7 + $0xf0] sm:$0xff]
    %v2189 = vld [vmem:[#allocation7 + $0xf8] sm:$0xff]
    %v2190 = vld [vmem:[#allocation7 + $0x100] sm:$0xff]
    %v2191 = vld [vmem:[#allocation7 + $0x108] sm:$0xff]
    %v2192 = vld [vmem:[#allocation7 + $0x110] sm:$0xff]
    %v2193 = vld [vmem:[#allocation7 + $0x118] sm:$0xff]
    %v2194 = vld [vmem:[#allocation7 + $0x120] sm:$0xff]
    %v2195 = vld [vmem:[#allocation7 + $0x128] sm:$0xff]
    %v2196 = vld [vmem:[#allocation7 + $0x130] sm:$0xff]
    %v2197 = vld [vmem:[#allocation7 + $0x138] sm:$0xff]
    %v2198 = vld [vmem:[#allocation7 + $0x140] sm:$0xff]
    %v2199 = vld [vmem:[#allocation7 + $0x148] sm:$0xff]
    %v2200 = vld [vmem:[#allocation7 + $0x150] sm:$0xff]
    %v2201 = vld [vmem:[#allocation7 + $0x158] sm:$0xff]
    %v2202 = vld [vmem:[#allocation7 + $0x160] sm:$0xff]
    %v2203 = vld [vmem:[#allocation7 + $0x168] sm:$0xff]
    %v2204 = vld [vmem:[#allocation7 + $0x170] sm:$0xff]
    %v2205 = vld [vmem:[#allocation7 + $0x178] sm:$0xff]
    %v2206 = vld [vmem:[#allocation7 + $0x180] sm:$0xff]
    %v2207 = vld [vmem:[#allocation7 + $0x188] sm:$0xff]
    %v2208 = vld [vmem:[#allocation7 + $0x190] sm:$0xff]
    %v2209 = vld [vmem:[#allocation7 + $0x198] sm:$0xff]
    %v2210 = vld [vmem:[#allocation7 + $0x1a0] sm:$0xff]
    %v2211 = vld [vmem:[#allocation7 + $0x1a8] sm:$0xff]
    %v2212 = vld [vmem:[#allocation7 + $0x1b0] sm:$0xff]
    %v2213 = vld [vmem:[#allocation7 + $0x1b8] sm:$0xff]
    %v2214 = vld [vmem:[#allocation7 + $0x1c0] sm:$0xff]
    %v2215 = vld [vmem:[#allocation7 + $0x1c8] sm:$0xff]
    %v2216 = vld [vmem:[#allocation7 + $0x1d0] sm:$0xff]
    %v2217 = vld [vmem:[#allocation7 + $0x1d8] sm:$0xff]
    %v2218 = vld [vmem:[#allocation7 + $0x1e0] sm:$0xff]
    %v2219 = vld [vmem:[#allocation7 + $0x1e8] sm:$0xff]
    %v2220 = vld [vmem:[#allocation7 + $0x1f0] sm:$0xff]
    %v2221 = vld [vmem:[#allocation7 + $0x1f8] sm:$0xff]
    %v2222 = vld [vmem:[#allocation9] sm:$0x3]
    %v2224 = vlaneseq
    %v2225 = vshrl.u32 %v2224, 7
    %v2226 = vsub.s32 0, %v2225
    %v2227 = vrot.slane %v2222, %v2226
    %v2228 = vlaneseq
    %v2229 = vshrl.u32 %v2228, 7
    %v2230 = vsub.s32 1, %v2229
    %v2231 = vrot.slane %v2222, %v2230
    %v2298 = vunpack.c.l.b16 %v2158
    %v2299 = vunpack.c.h.b16 %v2158
    %v2300 = vunpack.c.l.b16 %v2159
    %v2301 = vunpack.c.h.b16 %v2159
    %v2302 = vunpack.c.l.b16 %v2160
    %v2303 = vunpack.c.h.b16 %v2160
    %v2304 = vunpack.c.l.b16 %v2161
    %v2305 = vunpack.c.h.b16 %v2161
    %v2306 = vunpack.c.l.b16 %v2162
    %v2307 = vunpack.c.h.b16 %v2162
    %v2308 = vunpack.c.l.b16 %v2163
    %v2309 = vunpack.c.h.b16 %v2163
    %v2310 = vunpack.c.l.b16 %v2164
    %v2311 = vunpack.c.h.b16 %v2164
    %v2312 = vunpack.c.l.b16 %v2165
    %v2313 = vunpack.c.h.b16 %v2165
    %v2314 = vunpack.c.l.b16 %v2166
    %v2315 = vunpack.c.h.b16 %v2166
    %v2316 = vunpack.c.l.b16 %v2167
    %v2317 = vunpack.c.h.b16 %v2167
    %v2318 = vunpack.c.l.b16 %v2168
    %v2319 = vunpack.c.h.b16 %v2168
    %v2320 = vunpack.c.l.b16 %v2169
    %v2321 = vunpack.c.h.b16 %v2169
    %v2322 = vunpack.c.l.b16 %v2170
    %v2323 = vunpack.c.h.b16 %v2170
    %v2324 = vunpack.c.l.b16 %v2171
    %v2325 = vunpack.c.h.b16 %v2171
    %v2326 = vunpack.c.l.b16 %v2172
    %v2327 = vunpack.c.h.b16 %v2172
    %v2328 = vunpack.c.l.b16 %v2173
    %v2329 = vunpack.c.h.b16 %v2173
    %v2330 = vunpack.c.l.b16 %v2174
    %v2331 = vunpack.c.h.b16 %v2174
    %v2332 = vunpack.c.l.b16 %v2175
    %v2333 = vunpack.c.h.b16 %v2175
    %v2334 = vunpack.c.l.b16 %v2176
    %v2335 = vunpack.c.h.b16 %v2176
    %v2336 = vunpack.c.l.b16 %v2177
    %v2337 = vunpack.c.h.b16 %v2177
    %v2338 = vunpack.c.l.b16 %v2178
    %v2339 = vunpack.c.h.b16 %v2178
    %v2340 = vunpack.c.l.b16 %v2179
    %v2341 = vunpack.c.h.b16 %v2179
    %v2342 = vunpack.c.l.b16 %v2180
    %v2343 = vunpack.c.h.b16 %v2180
    %v2344 = vunpack.c.l.b16 %v2181
    %v2345 = vunpack.c.h.b16 %v2181
    %v2346 = vunpack.c.l.b16 %v2182
    %v2347 = vunpack.c.h.b16 %v2182
    %v2348 = vunpack.c.l.b16 %v2183
    %v2349 = vunpack.c.h.b16 %v2183
    %v2350 = vunpack.c.l.b16 %v2184
    %v2351 = vunpack.c.h.b16 %v2184
    %v2352 = vunpack.c.l.b16 %v2185
    %v2353 = vunpack.c.h.b16 %v2185
    %v2354 = vunpack.c.l.b16 %v2186
    %v2355 = vunpack.c.h.b16 %v2186
    %v2356 = vunpack.c.l.b16 %v2187
    %v2357 = vunpack.c.h.b16 %v2187
    %v2358 = vunpack.c.l.b16 %v2188
    %v2359 = vunpack.c.h.b16 %v2188
    %v2360 = vunpack.c.l.b16 %v2189
    %v2361 = vunpack.c.h.b16 %v2189
    %v2362 = vunpack.c.l.b16 %v2190
    %v2363 = vunpack.c.h.b16 %v2190
    %v2364 = vunpack.c.l.b16 %v2191
    %v2365 = vunpack.c.h.b16 %v2191
    %v2366 = vunpack.c.l.b16 %v2192
    %v2367 = vunpack.c.h.b16 %v2192
    %v2368 = vunpack.c.l.b16 %v2193
    %v2369 = vunpack.c.h.b16 %v2193
    %v2370 = vunpack.c.l.b16 %v2194
    %v2371 = vunpack.c.h.b16 %v2194
    %v2372 = vunpack.c.l.b16 %v2195
    %v2373 = vunpack.c.h.b16 %v2195
    %v2374 = vunpack.c.l.b16 %v2196
    %v2375 = vunpack.c.h.b16 %v2196
    %v2376 = vunpack.c.l.b16 %v2197
    %v2377 = vunpack.c.h.b16 %v2197
    %v2378 = vunpack.c.l.b16 %v2198
    %v2379 = vunpack.c.h.b16 %v2198
    %v2380 = vunpack.c.l.b16 %v2199
    %v2381 = vunpack.c.h.b16 %v2199
    %v2382 = vunpack.c.l.b16 %v2200
    %v2383 = vunpack.c.h.b16 %v2200
    %v2384 = vunpack.c.l.b16 %v2201
    %v2385 = vunpack.c.h.b16 %v2201
    %v2386 = vunpack.c.l.b16 %v2202
    %v2387 = vunpack.c.h.b16 %v2202
    %v2388 = vunpack.c.l.b16 %v2203
    %v2389 = vunpack.c.h.b16 %v2203
    %v2390 = vunpack.c.l.b16 %v2204
    %v2391 = vunpack.c.h.b16 %v2204
    %v2392 = vunpack.c.l.b16 %v2205
    %v2393 = vunpack.c.h.b16 %v2205
    %v2394 = vunpack.c.l.b16 %v2206
    %v2395 = vunpack.c.h.b16 %v2206
    %v2396 = vunpack.c.l.b16 %v2207
    %v2397 = vunpack.c.h.b16 %v2207
    %v2398 = vunpack.c.l.b16 %v2208
    %v2399 = vunpack.c.h.b16 %v2208
    %v2400 = vunpack.c.l.b16 %v2209
    %v2401 = vunpack.c.h.b16 %v2209
    %v2402 = vunpack.c.l.b16 %v2210
    %v2403 = vunpack.c.h.b16 %v2210
    %v2404 = vunpack.c.l.b16 %v2211
    %v2405 = vunpack.c.h.b16 %v2211
    %v2406 = vunpack.c.l.b16 %v2212
    %v2407 = vunpack.c.h.b16 %v2212
    %v2408 = vunpack.c.l.b16 %v2213
    %v2409 = vunpack.c.h.b16 %v2213
    %v2410 = vunpack.c.l.b16 %v2214
    %v2411 = vunpack.c.h.b16 %v2214
    %v2412 = vunpack.c.l.b16 %v2215
    %v2413 = vunpack.c.h.b16 %v2215
    %v2414 = vunpack.c.l.b16 %v2216
    %v2415 = vunpack.c.h.b16 %v2216
    %v2416 = vunpack.c.l.b16 %v2217
    %v2417 = vunpack.c.h.b16 %v2217
    %v2418 = vunpack.c.l.b16 %v2218
    %v2419 = vunpack.c.h.b16 %v2218
    %v2420 = vunpack.c.l.b16 %v2219
    %v2421 = vunpack.c.h.b16 %v2219
    %v2422 = vunpack.c.l.b16 %v2220
    %v2423 = vunpack.c.h.b16 %v2220
    %v2424 = vunpack.c.l.b16 %v2221
    %v2425 = vunpack.c.h.b16 %v2221
    %v2426 = vpack.c.b16 %v2300, %v2298
    %v2427 = vpack.c.b16 %v2301, %v2299
    %v2428 = vpack.c.b16 %v2304, %v2302
    %v2429 = vpack.c.b16 %v2305, %v2303
    %v2430 = vpack.c.b16 %v2308, %v2306
    %v2431 = vpack.c.b16 %v2309, %v2307
    %v2432 = vpack.c.b16 %v2312, %v2310
    %v2433 = vpack.c.b16 %v2313, %v2311
    %v2434 = vpack.c.b16 %v2316, %v2314
    %v2435 = vpack.c.b16 %v2317, %v2315
    %v2436 = vpack.c.b16 %v2320, %v2318
    %v2437 = vpack.c.b16 %v2321, %v2319
    %v2438 = vpack.c.b16 %v2324, %v2322
    %v2439 = vpack.c.b16 %v2325, %v2323
    %v2440 = vpack.c.b16 %v2328, %v2326
    %v2441 = vpack.c.b16 %v2329, %v2327
    %v2442 = vpack.c.b16 %v2332, %v2330
    %v2443 = vpack.c.b16 %v2333, %v2331
    %v2444 = vpack.c.b16 %v2336, %v2334
    %v2445 = vpack.c.b16 %v2337, %v2335
    %v2446 = vpack.c.b16 %v2340, %v2338
    %v2447 = vpack.c.b16 %v2341, %v2339
    %v2448 = vpack.c.b16 %v2344, %v2342
    %v2449 = vpack.c.b16 %v2345, %v2343
    %v2450 = vpack.c.b16 %v2348, %v2346
    %v2451 = vpack.c.b16 %v2349, %v2347
    %v2452 = vpack.c.b16 %v2352, %v2350
    %v2453 = vpack.c.b16 %v2353, %v2351
    %v2454 = vpack.c.b16 %v2356, %v2354
    %v2455 = vpack.c.b16 %v2357, %v2355
    %v2456 = vpack.c.b16 %v2360, %v2358
    %v2457 = vpack.c.b16 %v2361, %v2359
    %v2458 = vpack.c.b16 %v2364, %v2362
    %v2459 = vpack.c.b16 %v2365, %v2363
    %v2460 = vpack.c.b16 %v2368, %v2366
    %v2461 = vpack.c.b16 %v2369, %v2367
    %v2462 = vpack.c.b16 %v2372, %v2370
    %v2463 = vpack.c.b16 %v2373, %v2371
    %v2464 = vpack.c.b16 %v2376, %v2374
    %v2465 = vpack.c.b16 %v2377, %v2375
    %v2466 = vpack.c.b16 %v2380, %v2378
    %v2467 = vpack.c.b16 %v2381, %v2379
    %v2468 = vpack.c.b16 %v2384, %v2382
    %v2469 = vpack.c.b16 %v2385, %v2383
    %v2470 = vpack.c.b16 %v2388, %v2386
    %v2471 = vpack.c.b16 %v2389, %v2387
    %v2472 = vpack.c.b16 %v2392, %v2390
    %v2473 = vpack.c.b16 %v2393, %v2391
    %v2474 = vpack.c.b16 %v2396, %v2394
    %v2475 = vpack.c.b16 %v2397, %v2395
    %v2476 = vpack.c.b16 %v2400, %v2398
    %v2477 = vpack.c.b16 %v2401, %v2399
    %v2478 = vpack.c.b16 %v2404, %v2402
    %v2479 = vpack.c.b16 %v2405, %v2403
    %v2480 = vpack.c.b16 %v2408, %v2406
    %v2481 = vpack.c.b16 %v2409, %v2407
    %v2482 = vpack.c.b16 %v2412, %v2410
    %v2483 = vpack.c.b16 %v2413, %v2411
    %v2484 = vpack.c.b16 %v2416, %v2414
    %v2485 = vpack.c.b16 %v2417, %v2415
    %v2486 = vpack.c.b16 %v2420, %v2418
    %v2487 = vpack.c.b16 %v2421, %v2419
    %v2488 = vpack.c.b16 %v2424, %v2422
    %v2489 = vpack.c.b16 %v2425, %v2423
    %2554 = vmatprep.subr.bf16.mxu0 %v2441
    %2555 = vmatpush1.bf16.msra.mxu0 %v2440
    %2556 = vmatprep.subr.bf16.mxu0 %v2439
    %2557 = vmatpush1.bf16.msra.mxu0 %v2438
    %2558 = vmatprep.subr.bf16.mxu0 %v2437
    %2559 = vmatpush1.bf16.msra.mxu0 %v2436
    %2560 = vmatprep.subr.bf16.mxu0 %v2435
    %2561 = vmatpush1.bf16.msra.mxu0 %v2434
    %2562 = vmatprep.subr.bf16.mxu0 %v2433
    %2563 = vmatpush1.bf16.msra.mxu0 %v2432
    %2564 = vmatprep.subr.bf16.mxu0 %v2431
    %2565 = vmatpush1.bf16.msra.mxu0 %v2430
    %2566 = vmatprep.subr.bf16.mxu0 %v2429
    %2567 = vmatpush1.bf16.msra.mxu0 %v2428
    %2568 = vmatprep.subr.bf16.mxu0 %v2427
    %2569 = vmatpush1.bf16.msra.mxu0 %v2426
    %2570 = vmatprep.subr.bf16.mxu0 %v2457
    %2571 = vmatpush2.bf16.msra.mxu0 %v2456
    %2572 = vmatprep.subr.bf16.mxu0 %v2455
    %2573 = vmatpush2.bf16.msra.mxu0 %v2454
    %2574 = vmatprep.subr.bf16.mxu0 %v2453
    %2575 = vmatpush2.bf16.msra.mxu0 %v2452
    %2576 = vmatprep.subr.bf16.mxu0 %v2451
    %2577 = vmatpush2.bf16.msra.mxu0 %v2450
    %2578 = vmatprep.subr.bf16.mxu0 %v2449
    %2579 = vmatpush2.bf16.msra.mxu0 %v2448
    %2580 = vmatprep.subr.bf16.mxu0 %v2447
    %2581 = vmatpush2.bf16.msra.mxu0 %v2446
    %2582 = vmatprep.subr.bf16.mxu0 %v2445
    %2583 = vmatpush2.bf16.msra.mxu0 %v2444
    %2584 = vmatprep.subr.bf16.mxu0 %v2443
    %2585 = vmatpush2.bf16.msra.mxu0 %v2442
    %2586 = vmatprep.mubr.bf16.mxu0 %v2155
    %2587 = vmatmul.mubr.bf16.gmra.mxu0 %v2154
    %v2588 = vpop.f32.mrf.mxu0
    %v2589 = vadd.f32 %v2227, %v2588
    %v2590 = vpop.f32.mrf.mxu0
    %v2591 = vadd.f32 %v2231, %v2590
    %v2592 = vpop.f32.mrf.mxu0
    %v2593 = vpop.f32.mrf.mxu0
    %2594 = vdwg.mxu0
    %2595 = vmatprep.subr.bf16.mxu0 %v2473
    %2596 = vmatpush1.bf16.msra.mxu0 %v2472
    %2597 = vmatprep.subr.bf16.mxu0 %v2471
    %2598 = vmatpush1.bf16.msra.mxu0 %v2470
    %2599 = vmatprep.subr.bf16.mxu0 %v2469
    %2600 = vmatpush1.bf16.msra.mxu0 %v2468
    %2601 = vmatprep.subr.bf16.mxu0 %v2467
    %2602 = vmatpush1.bf16.msra.mxu0 %v2466
    %2603 = vmatprep.subr.bf16.mxu0 %v2465
    %2604 = vmatpush1.bf16.msra.mxu0 %v2464
    %2605 = vmatprep.subr.bf16.mxu0 %v2463
    %2606 = vmatpush1.bf16.msra.mxu0 %v2462
    %2607 = vmatprep.subr.bf16.mxu0 %v2461
    %2608 = vmatpush1.bf16.msra.mxu0 %v2460
    %2609 = vmatprep.subr.bf16.mxu0 %v2459
    %2610 = vmatpush1.bf16.msra.mxu0 %v2458
    %2611 = vmatprep.subr.bf16.mxu0 %v2489
    %2612 = vmatpush2.bf16.msra.mxu0 %v2488
    %2613 = vmatprep.subr.bf16.mxu0 %v2487
    %2614 = vmatpush2.bf16.msra.mxu0 %v2486
    %2615 = vmatprep.subr.bf16.mxu0 %v2485
    %2616 = vmatpush2.bf16.msra.mxu0 %v2484
    %2617 = vmatprep.subr.bf16.mxu0 %v2483
    %2618 = vmatpush2.bf16.msra.mxu0 %v2482
    %2619 = vmatprep.subr.bf16.mxu0 %v2481
    %2620 = vmatpush2.bf16.msra.mxu0 %v2480
    %2621 = vmatprep.subr.bf16.mxu0 %v2479
    %2622 = vmatpush2.bf16.msra.mxu0 %v2478
    %2623 = vmatprep.subr.bf16.mxu0 %v2477
    %2624 = vmatpush2.bf16.msra.mxu0 %v2476
    %2625 = vmatprep.subr.bf16.mxu0 %v2475
    %2626 = vmatpush2.bf16.msra.mxu0 %v2474
    %2627 = vmatprep.mubr.bf16.mxu0 %v2157
    %2628 = vmatmul.mubr.bf16.gmra.mxu0 %v2156
    %v2629 = vpop.f32.mrf.mxu0
    %v2630 = vadd.f32 %v2589, %v2629
    %v2631 = vpop.f32.mrf.mxu0
    %v2632 = vadd.f32 %v2591, %v2631
    %v2633 = vpop.f32.mrf.mxu0
    %v2634 = vpop.f32.mrf.mxu0
    %2635 = vdwg.mxu0
    %v2636 = vmax.f32 %v2630, 0.0
    %v2637 = vmax.f32 %v2632, 0.0
    %v2638 = vld [vmem:[%s7] sm:$0x3]
    %v2639 = vld [vmem:[#allocation10] sm:$0x3]
    %v2640 = vadd.f32 %v2636, %v2637
    %2641 = vadd.xlane.f32.xlu0 %v2640
    %v2642 = vpop.xlane.xlu0 %2641
    %v2643 = vrcp.pop 256.0
    %v2644 = vmul.f32 %v2642, %v2643
    %v2645 = vsub.f32 %v2636, %v2644
    %v2646 = vsub.f32 %v2637, %v2644
    %v2647 = vmul.f32 %v2645, %v2645
    %v2648 = vmul.f32 %v2646, %v2646
    %v2649 = vadd.f32 %v2647, %v2648
    %2650 = vadd.xlane.f32.xlu0 %v2649
    %v2651 = vpop.xlane.xlu0 %2650
    %v2652 = vmul.f32 %v2651, %v2643
    %v2653 = vadd.f32 %v2652, 1e-05
    %v2654 = vrsqrt.pop %v2653
    %v2655 = vmul.f32 %v2645, %v2654
    %v2656 = vmul.f32 %v2646, %v2654
    %v2658 = vlaneseq
    %v2659 = vshrl.u32 %v2658, 7
    %v2660 = vsub.s32 0, %v2659
    %v2661 = vrot.slane %v2638, %v2660
    %v2662 = vlaneseq
    %v2663 = vshrl.u32 %v2662, 7
    %v2664 = vsub.s32 1, %v2663
    %v2665 = vrot.slane %v2638, %v2664
    %v2668 = vmul.f32 %v2655, %v2661
    %v2669 = vmul.f32 %v2656, %v2665
    %v2671 = vlaneseq
    %v2672 = vshrl.u32 %v2671, 7
    %v2673 = vsub.s32 0, %v2672
    %v2674 = vrot.slane %v2639, %v2673
    %v2675 = vlaneseq
    %v2676 = vshrl.u32 %v2675, 7
    %v2677 = vsub.s32 1, %v2676
    %v2678 = vrot.slane %v2639, %v2677
    %v2681 = vadd.f32 %v2668, %v2674
    %v2682 = vadd.f32 %v2669, %v2678
    %v2683 = vpack.c.bf16 %v2681, %v2681
    %v2684 = vpack.c.bf16 %v2682, %v2682
    %v2685 = vld [vmem:[#allocation12] sm:$0xf]
    %v2686 = vld [vmem:[#allocation12 + $0x4] sm:$0xf]
    %v2687 = vld [vmem:[#allocation12 + $0x8] sm:$0xf]
    %v2688 = vld [vmem:[#allocation12 + $0xc] sm:$0xf]
    %v2689 = vld [vmem:[#allocation12 + $0x10] sm:$0xf]
    %v2690 = vld [vmem:[#allocation12 + $0x14] sm:$0xf]
    %v2691 = vld [vmem:[#allocation12 + $0x18] sm:$0xf]
    %v2692 = vld [vmem:[#allocation12 + $0x1c] sm:$0xf]
    %v2693 = vld [vmem:[#allocation12 + $0x20] sm:$0xf]
    %v2694 = vld [vmem:[#allocation12 + $0x24] sm:$0xf]
    %v2695 = vld [vmem:[#allocation12 + $0x28] sm:$0xf]
    %v2696 = vld [vmem:[#allocation12 + $0x2c] sm:$0xf]
    %v2697 = vld [vmem:[#allocation12 + $0x30] sm:$0xf]
    %v2698 = vld [vmem:[#allocation12 + $0x34] sm:$0xf]
    %v2699 = vld [vmem:[#allocation12 + $0x38] sm:$0xf]
    %v2700 = vld [vmem:[#allocation12 + $0x3c] sm:$0xf]
    %v2701 = vld [vmem:[#allocation12 + $0x40] sm:$0xf]
    %v2702 = vld [vmem:[#allocation12 + $0x44] sm:$0xf]
    %v2703 = vld [vmem:[#allocation12 + $0x48] sm:$0xf]
    %v2704 = vld [vmem:[#allocation12 + $0x4c] sm:$0xf]
    %v2705 = vld [vmem:[#allocation12 + $0x50] sm:$0xf]
    %v2706 = vld [vmem:[#allocation12 + $0x54] sm:$0xf]
    %v2707 = vld [vmem:[#allocation12 + $0x58] sm:$0xf]
    %v2708 = vld [vmem:[#allocation12 + $0x5c] sm:$0xf]
    %v2709 = vld [vmem:[#allocation12 + $0x60] sm:$0xf]
    %v2710 = vld [vmem:[#allocation12 + $0x64] sm:$0xf]
    %v2711 = vld [vmem:[#allocation12 + $0x68] sm:$0xf]
    %v2712 = vld [vmem:[#allocation12 + $0x6c] sm:$0xf]
    %v2713 = vld [vmem:[#allocation12 + $0x70] sm:$0xf]
    %v2714 = vld [vmem:[#allocation12 + $0x74] sm:$0xf]
    %v2715 = vld [vmem:[#allocation12 + $0x78] sm:$0xf]
    %v2716 = vld [vmem:[#allocation12 + $0x7c] sm:$0xf]
    %v2717 = vld [vmem:[#allocation13] sm:$0x1]
    %v2719 = vlaneseq
    %v2720 = vshrl.u32 %v2719, 7
    %v2721 = vsub.s32 0, %v2720
    %v2722 = vrot.slane %v2717, %v2721
    %v2756 = vunpack.c.l.b16 %v2685
    %v2757 = vunpack.c.l.b16 %v2686
    %v2758 = vunpack.c.l.b16 %v2687
    %v2759 = vunpack.c.l.b16 %v2688
    %v2760 = vunpack.c.l.b16 %v2689
    %v2761 = vunpack.c.l.b16 %v2690
    %v2762 = vunpack.c.l.b16 %v2691
    %v2763 = vunpack.c.l.b16 %v2692
    %v2764 = vunpack.c.l.b16 %v2693
    %v2765 = vunpack.c.l.b16 %v2694
    %v2766 = vunpack.c.l.b16 %v2695
    %v2767 = vunpack.c.l.b16 %v2696
    %v2768 = vunpack.c.l.b16 %v2697
    %v2769 = vunpack.c.l.b16 %v2698
    %v2770 = vunpack.c.l.b16 %v2699
    %v2771 = vunpack.c.l.b16 %v2700
    %v2772 = vunpack.c.l.b16 %v2701
    %v2773 = vunpack.c.l.b16 %v2702
    %v2774 = vunpack.c.l.b16 %v2703
    %v2775 = vunpack.c.l.b16 %v2704
    %v2776 = vunpack.c.l.b16 %v2705
    %v2777 = vunpack.c.l.b16 %v2706
    %v2778 = vunpack.c.l.b16 %v2707
    %v2779 = vunpack.c.l.b16 %v2708
    %v2780 = vunpack.c.l.b16 %v2709
    %v2781 = vunpack.c.l.b16 %v2710
    %v2782 = vunpack.c.l.b16 %v2711
    %v2783 = vunpack.c.l.b16 %v2712
    %v2784 = vunpack.c.l.b16 %v2713
    %v2785 = vunpack.c.l.b16 %v2714
    %v2786 = vunpack.c.l.b16 %v2715
    %v2787 = vunpack.c.l.b16 %v2716
    %v2788 = vpack.c.b16 %v2757, %v2756
    %v2789 = vpack.c.b16 %v2759, %v2758
    %v2790 = vpack.c.b16 %v2761, %v2760
    %v2791 = vpack.c.b16 %v2763, %v2762
    %v2792 = vpack.c.b16 %v2765, %v2764
    %v2793 = vpack.c.b16 %v2767, %v2766
    %v2794 = vpack.c.b16 %v2769, %v2768
    %v2795 = vpack.c.b16 %v2771, %v2770
    %v2796 = vpack.c.b16 %v2773, %v2772
    %v2797 = vpack.c.b16 %v2775, %v2774
    %v2798 = vpack.c.b16 %v2777, %v2776
    %v2799 = vpack.c.b16 %v2779, %v2778
    %v2800 = vpack.c.b16 %v2781, %v2780
    %v2801 = vpack.c.b16 %v2783, %v2782
    %v2802 = vpack.c.b16 %v2785, %v2784
    %v2803 = vpack.c.b16 %v2787, %v2786
    %2820 = vmatprep.subr.bf16.mxu0 0
    %2821 = vmatpush1.bf16.msra.mxu0 %v2795
    %2822 = vmatprep.subr.bf16.mxu0 0
    %2823 = vmatpush1.bf16.msra.mxu0 %v2794
    %2824 = vmatprep.subr.bf16.mxu0 0
    %2825 = vmatpush1.bf16.msra.mxu0 %v2793
    %2826 = vmatprep.subr.bf16.mxu0 0
    %2827 = vmatpush1.bf16.msra.mxu0 %v2792
    %2828 = vmatprep.subr.bf16.mxu0 0
    %2829 = vmatpush1.bf16.msra.mxu0 %v2791
    %2830 = vmatprep.subr.bf16.mxu0 0
    %2831 = vmatpush1.bf16.msra.mxu0 %v2790
    %2832 = vmatprep.subr.bf16.mxu0 0
    %2833 = vmatpush1.bf16.msra.mxu0 %v2789
    %2834 = vmatprep.subr.bf16.mxu0 0
    %2835 = vmatpush1.bf16.msra.mxu0 %v2788
    %2836 = vmatprep.subr.bf16.mxu0 0
    %2837 = vmatpush2.bf16.msra.mxu0 %v2803
    %2838 = vmatprep.subr.bf16.mxu0 0
    %2839 = vmatpush2.bf16.msra.mxu0 %v2802
    %2840 = vmatprep.subr.bf16.mxu0 0
    %2841 = vmatpush2.bf16.msra.mxu0 %v2801
    %2842 = vmatprep.subr.bf16.mxu0 0
    %2843 = vmatpush2.bf16.msra.mxu0 %v2800
    %2844 = vmatprep.subr.bf16.mxu0 0
    %2845 = vmatpush2.bf16.msra.mxu0 %v2799
    %2846 = vmatprep.subr.bf16.mxu0 0
    %2847 = vmatpush2.bf16.msra.mxu0 %v2798
    %2848 = vmatprep.subr.bf16.mxu0 0
    %2849 = vmatpush2.bf16.msra.mxu0 %v2797
    %2850 = vmatprep.subr.bf16.mxu0 0
    %2851 = vmatpush2.bf16.msra.mxu0 %v2796
    %2852 = vmatprep.mubr.bf16.mxu0 %v2684
    %2853 = vmatmul.mubr.bf16.gmra.mxu0 %v2683
    %v2854 = vpop.f32.mrf.mxu0
    %v2855 = vadd.f32 %v2722, %v2854
    %v2856 = vpop.f32.mrf.mxu0
    %v2857 = vpop.f32.mrf.mxu0
    %v2858 = vpop.f32.mrf.mxu0
    %2859 = vdwg.mxu0
    %v2860 = vtanh.pop %v2855
    %v2861 = vpack.c.bf16 %v2860, %v2860
    %v2862 = vld [vmem:[#allocation15] sm:$0xf]
    %v2863 = vld [vmem:[#allocation15 + $0x4] sm:$0xf]
    %v2864 = vld [vmem:[#allocation15 + $0x8] sm:$0xf]
    %v2865 = vld [vmem:[#allocation15 + $0xc] sm:$0xf]
    %v2866 = vld [vmem:[#allocation15 + $0x10] sm:$0xf]
    %v2867 = vld [vmem:[#allocation15 + $0x14] sm:$0xf]
    %v2868 = vld [vmem:[#allocation15 + $0x18] sm:$0xf]
    %v2869 = vld [vmem:[#allocation15 + $0x1c] sm:$0xf]
    %v2870 = vld [vmem:[#allocation15 + $0x20] sm:$0xf]
    %v2871 = vld [vmem:[#allocation15 + $0x24] sm:$0xf]
    %v2872 = vld [vmem:[#allocation15 + $0x28] sm:$0xf]
    %v2873 = vld [vmem:[#allocation15 + $0x2c] sm:$0xf]
    %v2874 = vld [vmem:[#allocation15 + $0x30] sm:$0xf]
    %v2875 = vld [vmem:[#allocation15 + $0x34] sm:$0xf]
    %v2876 = vld [vmem:[#allocation15 + $0x38] sm:$0xf]
    %v2877 = vld [vmem:[#allocation15 + $0x3c] sm:$0xf]
    %v2878 = vld [vmem:[#allocation16] sm:$0x1]
    %v2880 = vlaneseq
    %v2881 = vshrl.u32 %v2880, 7
    %v2882 = vsub.s32 0, %v2881
    %v2883 = vrot.slane %v2878, %v2882
    %v2901 = vunpack.c.l.b16 %v2862
    %v2902 = vunpack.c.l.b16 %v2863
    %v2903 = vunpack.c.l.b16 %v2864
    %v2904 = vunpack.c.l.b16 %v2865
    %v2905 = vunpack.c.l.b16 %v2866
    %v2906 = vunpack.c.l.b16 %v2867
    %v2907 = vunpack.c.l.b16 %v2868
    %v2908 = vunpack.c.l.b16 %v2869
    %v2909 = vunpack.c.l.b16 %v2870
    %v2910 = vunpack.c.l.b16 %v2871
    %v2911 = vunpack.c.l.b16 %v2872
    %v2912 = vunpack.c.l.b16 %v2873
    %v2913 = vunpack.c.l.b16 %v2874
    %v2914 = vunpack.c.l.b16 %v2875
    %v2915 = vunpack.c.l.b16 %v2876
    %v2916 = vunpack.c.l.b16 %v2877
    %v2917 = vpack.c.b16 %v2902, %v2901
    %v2918 = vpack.c.b16 %v2904, %v2903
    %v2919 = vpack.c.b16 %v2906, %v2905
    %v2920 = vpack.c.b16 %v2908, %v2907
    %v2921 = vpack.c.b16 %v2910, %v2909
    %v2922 = vpack.c.b16 %v2912, %v2911
    %v2923 = vpack.c.b16 %v2914, %v2913
    %v2924 = vpack.c.b16 %v2916, %v2915
    %2933 = vmatprep.subr.bf16.mxu0 0
    %2934 = vmatpush1.bf16.msra.mxu0 %v2924
    %2935 = vmatprep.subr.bf16.mxu0 0
    %2936 = vmatpush1.bf16.msra.mxu0 %v2923
    %2937 = vmatprep.subr.bf16.mxu0 0
    %2938 = vmatpush1.bf16.msra.mxu0 %v2922
    %2939 = vmatprep.subr.bf16.mxu0 0
    %2940 = vmatpush1.bf16.msra.mxu0 %v2921
    %2941 = vmatprep.subr.bf16.mxu0 0
    %2942 = vmatpush1.bf16.msra.mxu0 %v2920
    %2943 = vmatprep.subr.bf16.mxu0 0
    %2944 = vmatpush1.bf16.msra.mxu0 %v2919
    %2945 = vmatprep.subr.bf16.mxu0 0
    %2946 = vmatpush1.bf16.msra.mxu0 %v2918
    %2947 = vmatprep.subr.bf16.mxu0 0
    %2948 = vmatpush1.bf16.msra.mxu0 %v2917
    %2949 = vmatprep.subr.bf16.mxu0 0
    %2950 = vmatpush2.bf16.msra.mxu0 0
    %2951 = vmatprep.subr.bf16.mxu0 0
    %2952 = vmatpush2.bf16.msra.mxu0 0
    %2953 = vmatprep.subr.bf16.mxu0 0
    %2954 = vmatpush2.bf16.msra.mxu0 0
    %2955 = vmatprep.subr.bf16.mxu0 0
    %2956 = vmatpush2.bf16.msra.mxu0 0
    %2957 = vmatprep.subr.bf16.mxu0 0
    %2958 = vmatpush2.bf16.msra.mxu0 0
    %2959 = vmatprep.subr.bf16.mxu0 0
    %2960 = vmatpush2.bf16.msra.mxu0 0
    %2961 = vmatprep.subr.bf16.mxu0 0
    %2962 = vmatpush2.bf16.msra.mxu0 0
    %2963 = vmatprep.subr.bf16.mxu0 0
    %2964 = vmatpush2.bf16.msra.mxu0 0
    %2965 = vmatprep.mubr.bf16.mxu0 0
    %2966 = vmatmul.mubr.bf16.gmra.mxu0 %v2861
    %v2967 = vpop.f32.mrf.mxu0
    %v2968 = vadd.f32 %v2883, %v2967
    %v2969 = vpop.f32.mrf.mxu0
    %v2970 = vpop.f32.mrf.mxu0
    %v2971 = vpop.f32.mrf.mxu0
    %2972 = vdwg.mxu0
    %v2973 = vtanh.pop %v2968
    %2974 = vst [vmem:[%s13] sm:$0xff] %v2973
    // Predicated region
    $region94: #{geo_head_forward.1} parent=1 // pred_check
      _
    $region95: #{geo_head_forward.1} parent=1 // pred_check_branch
      %2976 = sbr.rel (0) target = $region97
    $region96: #{geo_head_forward.1} parent=1 // pred_region
      _
    $region97: #{geo_head_forward.1} parent=1 // pred_fallthru
      _
    // Predicated region
    $region98: #{geo_head_forward.1} parent=1 // pred_check
      _
    $region99: #{geo_head_forward.1} parent=1 // pred_check_branch
      %2978 = sbr.rel (0) target = $region101
    $region100: #{geo_head_forward.1} parent=1 // pred_region
      _
    $region101: #{geo_head_forward.1} parent=1 // pred_fallthru
      _
    %2979 = vsyncpa [#allocation3], 1
    %2980 = vsyncpa [#allocation5], 1
    %2981 = vsyncpa [#allocation8], 1
    %2982 = vsyncpa [#allocation11], 1
    %2983 = vsyncpa [#allocation14], 1
    %2984 = vsyncpa [#allocation17], 1

</llo_original>
